<compile_context>
chip_gen: v7x
topology: tpu7x:2x2x1
jax: 0.10.0
libtpu: 0.0.40
codegen_flags: <defaults>
</compile_context>

<pallas_src>
import jax
import jax.numpy as jnp
from jax.experimental import pallas as pl
from jax.experimental.pallas import tpu as pltpu
import numpy as np


# ------------------------------------------------------------------ constants
# Row indices inside the packed per-network "vec" row-block of the weight slab.
ROW_B1, ROW_G1, ROW_BE1 = 0, 1, 2          # fc1 bias, LN1 gamma, LN1 beta
ROW_B2, ROW_G2, ROW_BE2 = 3, 4, 5          # fc2 bias, LN2 gamma, LN2 beta
ROW_BA = 6                                  # act_val bias          (critic)
ROW_HEAD_W = 7                              # q weight row / mu bias row
ROW_HEAD_B = 8                              # q bias (lane 0)       (critic)
VEC_ROWS = 16                               # padded to a full sublane tile
QPAD = 128                                  # lane-dense q output width


def _round_up(n, m):
    return ((n + m - 1) // m) * m


def _num_tensorcores():
    """1 TC on v5e/v6e, 2 TCs on v7x. Conservative fallback = 1."""
    try:
        kind = jax.devices()[0].device_kind.lower()
        if "v7" in kind or "7x" in kind:
            return 2
    except Exception:
        pass
    return 1


def _grid_tb(b, cap=2048):
    """Padded batch and batch-tile size.
    - 1 TC: single grid step (TB = B) -> no per-step pipeline overhead.
    - 2 TC (v7x): TB = B/2 -> grid of 2 'parallel' steps feeding both cores.
    """
    ntc = _num_tensorcores()
    bp = _round_up(b, 8 * ntc)
    tb = bp // ntc
    while tb > cap and tb % 2 == 0 and (tb // 2) % 8 == 0:
        tb //= 2
    return bp, tb


def _vmem_limit(weight_bytes, tb, lanes_per_row):
    """Generous but bounded VMEM budget: resident weight slabs (x2 buffering)
    plus double-buffered batch tiles plus slack; well under v7x's 64 MiB."""
    tiles = tb * lanes_per_row * 4
    return int(min(48 * 1024 * 1024, 2 * weight_bytes + 4 * tiles + (8 << 20)))


# ------------------------------------------------------------------ in-kernel math
def _layernorm(x, gamma, beta, n_valid, eps=1e-5):
    """Single-pass LayerNorm. `n_valid` is the true (unpadded) feature width;
    padded lanes of x are exactly 0 so the sums are exact."""
    inv_n = 1.0 / float(n_valid)
    mean = jnp.sum(x, axis=-1, keepdims=True) * inv_n
    mean_sq = jnp.sum(x * x, axis=-1, keepdims=True) * inv_n
    var = mean_sq - mean * mean
    return (x - mean) * jax.lax.rsqrt(var + eps) * gamma + beta


def _critic_branch(x, w_ref, dims):
    """Critic forward on a packed (TB, inpp) input and one weight slab."""
    in_dim, act_dim, l1, l2, l1p, l2p, inpp = dims
    win = w_ref[0:inpp, :]                              # [w1 | wa]  (inpp, l1p+l2p)
    w2 = w_ref[inpp:inpp + l1p, 0:l2p]                  # (l1p, l2p)
    vec = w_ref[inpp + l1p:inpp + l1p + VEC_ROWS, :]    # (16, l1p+l2p)

    # fc1(state) and act_val(action) as ONE MXU matmul, split at lane 128*k.
    ha = jnp.dot(x, win, preferred_element_type=jnp.float32)
    h = ha[:, :l1p]
    a = ha[:, l1p:l1p + l2p]

    h = h + vec[ROW_B1:ROW_B1 + 1, :l1p]
    h = _layernorm(h, vec[ROW_G1:ROW_G1 + 1, :l1p], vec[ROW_BE1:ROW_BE1 + 1, :l1p], l1)
    h = jnp.maximum(h, 0.0)
    h = jnp.dot(h, w2, preferred_element_type=jnp.float32) + vec[ROW_B2:ROW_B2 + 1, :l2p]
    h = _layernorm(h, vec[ROW_G2:ROW_G2 + 1, :l2p], vec[ROW_BE2:ROW_BE2 + 1, :l2p], l2)

    a = jnp.maximum(a + vec[ROW_BA:ROW_BA + 1, :l2p], 0.0)
    sa = jnp.maximum(h + a, 0.0)

    # N=1 q head as VPU multiply + lane reduce (no wasted MXU column).
    wq = vec[ROW_HEAD_W:ROW_HEAD_W + 1, :l2p]
    bq = vec[ROW_HEAD_B:ROW_HEAD_B + 1, 0:1]
    return jnp.sum(sa * wq, axis=-1, keepdims=True) + bq    # (TB, 1)


def _actor_branch(x, w_ref, dims):
    """Actor forward on a packed (TB, inpp) input and one weight slab."""
    in_dim, act_dim, l1, l2, l1p, l2p, actp, inpp = dims
    w1 = w_ref[0:inpp, 0:l1p]
    w2 = w_ref[inpp:inpp + l1p, 0:l2p]
    wmu = w_ref[inpp + l1p:inpp + l1p + l2p, 0:actp]
    vec = w_ref[inpp + l1p + l2p:inpp + l1p + l2p + VEC_ROWS, :]

    h = jnp.dot(x, w1, preferred_element_type=jnp.float32) + vec[ROW_B1:ROW_B1 + 1, :l1p]
    h = _layernorm(h, vec[ROW_G1:ROW_G1 + 1, :l1p], vec[ROW_BE1:ROW_BE1 + 1, :l1p], l1)
    h = jnp.maximum(h, 0.0)
    h = jnp.dot(h, w2, preferred_element_type=jnp.float32) + vec[ROW_B2:ROW_B2 + 1, :l2p]
    h = _layernorm(h, vec[ROW_G2:ROW_G2 + 1, :l2p], vec[ROW_BE2:ROW_BE2 + 1, :l2p], l2)
    h = jnp.maximum(h, 0.0)
    mu = jnp.dot(h, wmu, preferred_element_type=jnp.float32)
    mu = mu + vec[ROW_HEAD_W:ROW_HEAD_W + 1, :actp]
    return jnp.tanh(mu)                                       # (TB, actp)


# ------------------------------------------------------------------ kernels
def _make_critic_kernel(dims):
    def kernel(x_ref, w_ref, q_ref):
        q = _critic_branch(x_ref[...], w_ref, dims)
        # Lane-dense write: broadcast q across 128 lanes; sliced [:, :1] outside.
        q_ref[...] = jnp.broadcast_to(q, q_ref.shape).astype(q_ref.dtype)
    return kernel


def _make_actor_kernel(dims):
    def kernel(x_ref, w_ref, mu_ref):
        mu_ref[...] = _actor_branch(x_ref[...], w_ref, dims).astype(mu_ref.dtype)
    return kernel


def _make_fused_kernel(cdims, adims):
    def kernel(x_ref, cw_ref, aw_ref, q_ref, mu_ref):
        x = x_ref[...]
        q = _critic_branch(x, cw_ref, cdims)
        q_ref[...] = jnp.broadcast_to(q, q_ref.shape).astype(q_ref.dtype)
        mu_ref[...] = _actor_branch(x, aw_ref, adims).astype(mu_ref.dtype)
    return kernel


# ------------------------------------------------------------------ param / input packing
def pack_critic_params(p):
    in_dim, l1 = p["w1"].shape
    l2 = p["w2"].shape[1]
    act_dim = p["wa"].shape[0]
    l1p, l2p = _round_up(l1, 128), _round_up(l2, 128)
    inpp = _round_up(in_dim + act_dim, 128)
    width = l1p + l2p
    rows = inpp + l1p + VEC_ROWS
    slab = jnp.zeros((rows, width), jnp.float32)
    # combined layer-1 weight: [w1 | wa] against the packed [state | action] input
    slab = slab.at[:in_dim, :l1].set(p["w1"].astype(jnp.float32))
    slab = slab.at[in_dim:in_dim + act_dim, l1p:l1p + l2].set(p["wa"].astype(jnp.float32))
    # layer-2 weight
    slab = slab.at[inpp:inpp + l1, :l2].set(p["w2"].astype(jnp.float32))
    # vector block (biases, LN params, q head)
    v0 = inpp + l1p
    slab = slab.at[v0 + ROW_B1, :l1].set(p["b1"].reshape(-1))
    slab = slab.at[v0 + ROW_G1, :l1].set(p["g1"].reshape(-1))
    slab = slab.at[v0 + ROW_BE1, :l1].set(p["be1"].reshape(-1))
    slab = slab.at[v0 + ROW_B2, :l2].set(p["b2"].reshape(-1))
    slab = slab.at[v0 + ROW_G2, :l2].set(p["g2"].reshape(-1))
    slab = slab.at[v0 + ROW_BE2, :l2].set(p["be2"].reshape(-1))
    slab = slab.at[v0 + ROW_BA, :l2].set(p["ba"].reshape(-1))
    slab = slab.at[v0 + ROW_HEAD_W, :l2].set(p["wq"].reshape(-1))
    slab = slab.at[v0 + ROW_HEAD_B, 0].set(p["bq"].reshape(-1)[0])
    return {"slab": slab, "dims": (in_dim, act_dim, l1, l2, l1p, l2p, inpp)}


def pack_actor_params(p):
    in_dim, l1 = p["w1"].shape
    l2 = p["w2"].shape[1]
    act_dim = p["wmu"].shape[1]
    l1p, l2p = _round_up(l1, 128), _round_up(l2, 128)
    actp = _round_up(act_dim, 128)
    inpp = _round_up(in_dim + act_dim, 128)   # shared packed-input width with critic
    width = max(l1p, l2p, actp)
    rows = inpp + l1p + l2p + VEC_ROWS
    slab = jnp.zeros((rows, width), jnp.float32)
    slab = slab.at[:in_dim, :l1].set(p["w1"].astype(jnp.float32))     # action lanes -> 0 rows
    slab = slab.at[inpp:inpp + l1, :l2].set(p["w2"].astype(jnp.float32))
    slab = slab.at[inpp + l1p:inpp + l1p + l2, :act_dim].set(p["wmu"].astype(jnp.float32))
    v0 = inpp + l1p + l2p
    slab = slab.at[v0 + ROW_B1, :l1].set(p["b1"].reshape(-1))
    slab = slab.at[v0 + ROW_G1, :l1].set(p["g1"].reshape(-1))
    slab = slab.at[v0 + ROW_BE1, :l1].set(p["be1"].reshape(-1))
    slab = slab.at[v0 + ROW_B2, :l2].set(p["b2"].reshape(-1))
    slab = slab.at[v0 + ROW_G2, :l2].set(p["g2"].reshape(-1))
    slab = slab.at[v0 + ROW_BE2, :l2].set(p["be2"].reshape(-1))
    slab = slab.at[v0 + ROW_HEAD_W, :act_dim].set(p["bmu"].reshape(-1))
    return {"slab": slab, "dims": (in_dim, act_dim, l1, l2, l1p, l2p, actp, inpp)}


def pack_state_action(state, action, inpp, bp):
    """One lane-dense (bp, inpp) input slab: state in lanes [0,in_dim), action next."""
    B, in_dim = state.shape
    x = jnp.zeros((bp, inpp), jnp.float32)
    x = x.at[:B, :in_dim].set(state.astype(jnp.float32))
    if action is not None:
        act_dim = action.shape[1]
        x = x.at[:B, in_dim:in_dim + act_dim].set(action.astype(jnp.float32))
    return x


# ------------------------------------------------------------------ wrappers
def critic_forward(state, action, cp, tb=None):
    B = state.shape[0]
    in_dim, act_dim, l1, l2, l1p, l2p, inpp = cp["dims"]
    if tb is None:
        bp, TB = _grid_tb(B)
    else:
        TB = tb
        bp = _round_up(B, TB)
    x = pack_state_action(state, action, inpp, bp)
    slab = cp["slab"]
    flops = 2 * bp * (inpp * (l1p + l2p) + l1p * l2p + l2p)
    bytes_acc = int(x.size + slab.size + bp * QPAD) * 4
    q_slab = pl.pallas_call(
        _make_critic_kernel(cp["dims"]),
        out_shape=jax.ShapeDtypeStruct((bp, QPAD), jnp.float32),
        grid=(bp // TB,),
        in_specs=[pl.BlockSpec((TB, inpp), lambda i: (i, 0)),
                  pl.BlockSpec(slab.shape, lambda i: (0, 0))],
        out_specs=pl.BlockSpec((TB, QPAD), lambda i: (i, 0)),
        compiler_params=pltpu.CompilerParams(
            dimension_semantics=("parallel",),
            vmem_limit_bytes=_vmem_limit(slab.nbytes, TB, inpp + QPAD)),
        cost_estimate=pl.CostEstimate(flops=int(flops), transcendentals=int(2 * bp),
                                      bytes_accessed=bytes_acc),
    )(x, slab)
    return q_slab[:B, :1]


def actor_forward(state, ap, tb=None):
    B = state.shape[0]
    in_dim, act_dim, l1, l2, l1p, l2p, actp, inpp = ap["dims"]
    if tb is None:
        bp, TB = _grid_tb(B)
    else:
        TB = tb
        bp = _round_up(B, TB)
    x = pack_state_action(state, None, inpp, bp)
    slab = ap["slab"]
    flops = 2 * bp * (inpp * l1p + l1p * l2p + l2p * actp)
    bytes_acc = int(x.size + slab.size + bp * actp) * 4
    mu_slab = pl.pallas_call(
        _make_actor_kernel(ap["dims"]),
        out_shape=jax.ShapeDtypeStruct((bp, actp), jnp.float32),
        grid=(bp // TB,),
        in_specs=[pl.BlockSpec((TB, inpp), lambda i: (i, 0)),
                  pl.BlockSpec(slab.shape, lambda i: (0, 0))],
        out_specs=pl.BlockSpec((TB, actp), lambda i: (i, 0)),
        compiler_params=pltpu.CompilerParams(
            dimension_semantics=("parallel",),
            vmem_limit_bytes=_vmem_limit(slab.nbytes, TB, inpp + actp)),
        cost_estimate=pl.CostEstimate(flops=int(flops),
                                      transcendentals=int(bp * (2 + actp)),
                                      bytes_accessed=bytes_acc),
    )(x, slab)
    return mu_slab[:B, :act_dim]


def fused_forward(state, action, cp, ap, tb=None):
    """Critic(state, action) and Actor(state) in ONE pallas_call (two outputs)."""
    B = state.shape[0]
    c_in, c_act, _, _, cl1p, cl2p, c_inpp = cp["dims"]
    a_in, a_act, _, _, al1p, al2p, actp, a_inpp = ap["dims"]
    assert c_inpp == a_inpp, "critic/actor packed-input widths must match"
    inpp = c_inpp
    if tb is None:
        bp, TB = _grid_tb(B)
    else:
        TB = tb
        bp = _round_up(B, TB)
    x = pack_state_action(state, action, inpp, bp)
    cslab, aslab = cp["slab"], ap["slab"]
    flops = 2 * bp * (inpp * (cl1p + cl2p) + cl1p * cl2p + cl2p
                      + inpp * al1p + al1p * al2p + al2p * actp)
    bytes_acc = int(x.size + cslab.size + aslab.size + bp * (QPAD + actp)) * 4
    q_slab, mu_slab = pl.pallas_call(
        _make_fused_kernel(cp["dims"], ap["dims"]),
        out_shape=(jax.ShapeDtypeStruct((bp, QPAD), jnp.float32),
                   jax.ShapeDtypeStruct((bp, actp), jnp.float32)),
        grid=(bp // TB,),
        in_specs=[pl.BlockSpec((TB, inpp), lambda i: (i, 0)),
                  pl.BlockSpec(cslab.shape, lambda i: (0, 0)),
                  pl.BlockSpec(aslab.shape, lambda i: (0, 0))],
        out_specs=(pl.BlockSpec((TB, QPAD), lambda i: (i, 0)),
                   pl.BlockSpec((TB, actp), lambda i: (i, 0))),
        compiler_params=pltpu.CompilerParams(
            dimension_semantics=("parallel",),
            vmem_limit_bytes=_vmem_limit(cslab.nbytes + aslab.nbytes, TB,
                                         inpp + QPAD + actp)),
        cost_estimate=pl.CostEstimate(flops=int(flops),
                                      transcendentals=int(bp * (4 + actp)),
                                      bytes_accessed=bytes_acc),
    )(x, cslab, aslab)
    return q_slab[:B, :1], mu_slab[:B, :a_act]


# ------------------------------------------------------------------ params
def init_params(key, in_dim, act_dim, l1_size, l2_size):
    """Deterministic synthetic init mirroring the shapes of ddpg.Network."""
    ks = jax.random.split(key, 10)

    def unif(k, shape, bound):
        return jax.random.uniform(k, shape, jnp.float32, -bound, bound)

    iv1 = 1.0 / np.sqrt(l1_size)
    iv2 = 1.0 / np.sqrt(l2_size)
    iv3 = 0.003
    iva = 1.0 / np.sqrt(act_dim)
    ivm = 1.0 / np.sqrt(l2_size)

    return {
        "w1": unif(ks[0], (in_dim, l1_size), iv1),
        "b1": unif(ks[1], (1, l1_size), iv1),
        "g1": jnp.ones((1, l1_size), jnp.float32),
        "be1": jnp.zeros((1, l1_size), jnp.float32),
        "w2": unif(ks[2], (l1_size, l2_size), iv2),
        "b2": unif(ks[3], (1, l2_size), iv2),
        "g2": jnp.ones((1, l2_size), jnp.float32),
        "be2": jnp.zeros((1, l2_size), jnp.float32),
        "wa": unif(ks[4], (act_dim, l2_size), iva),
        "ba": unif(ks[5], (1, l2_size), iva),
        "wq": unif(ks[6], (l2_size, 1), iv3),
        "bq": unif(ks[7], (1, 1), iv3),
        "wmu": unif(ks[8], (l2_size, act_dim), ivm),
        "bmu": unif(ks[9], (1, act_dim), ivm),
    }


# ------------------------------------------------------------------ references
def _ref_layernorm(x, gamma, beta, eps=1e-5):
    mean = jnp.mean(x, axis=-1, keepdims=True)
    var = jnp.mean((x - mean) ** 2, axis=-1, keepdims=True)
    return (x - mean) * jax.lax.rsqrt(var + eps) * gamma + beta


def _ref_critic(state, action, p):
    h = state @ p["w1"] + p["b1"]
    h = _ref_layernorm(h, p["g1"], p["be1"])
    h = jnp.maximum(h, 0.0)
    h = h @ p["w2"] + p["b2"]
    h = _ref_layernorm(h, p["g2"], p["be2"])
    a = jnp.maximum(action @ p["wa"] + p["ba"], 0.0)
    sa = jnp.maximum(h + a, 0.0)
    return sa @ p["wq"] + p["bq"]


def _ref_actor(state, p):
    h = state @ p["w1"] + p["b1"]
    h = _ref_layernorm(h, p["g1"], p["be1"])
    h = jnp.maximum(h, 0.0)
    h = h @ p["w2"] + p["b2"]
    h = _ref_layernorm(h, p["g2"], p["be2"])
    h = jnp.maximum(h, 0.0)
    return jnp.tanh(h @ p["wmu"] + p["bmu"])


# ------------------------------------------------------------------ main
if __name__ == "__main__":
    key = jax.random.PRNGKey(0)
    B, IN_DIM, ACT_DIM, L1, L2 = 256, 16, 4, 32, 32

    kc, kka, ks, kact = jax.random.split(key, 4)
    critic_p = init_params(kc, IN_DIM, ACT_DIM, L1, L2)
    actor_p = init_params(kka, IN_DIM, ACT_DIM, L1, L2)
    state = jax.random.normal(ks, (B, IN_DIM), jnp.float32)
    action = jax.random.normal(kact, (B, ACT_DIM), jnp.float32)

    cpk = pack_critic_params(critic_p)
    apk = pack_actor_params(actor_p)

    # Generation-aware tiling: grid=(1,) on v5e/v6e, grid=(2,) 'parallel' on v7x.
    q_out = jax.block_until_ready(critic_forward(state, action, cpk))
    mu_out = jax.block_until_ready(actor_forward(state, apk))
    q_fused, mu_fused = fused_forward(state, action, cpk, apk)
    q_fused, mu_fused = jax.block_until_ready((q_fused, mu_fused))

    assert q_out.shape == (B, 1)
    assert mu_out.shape == (B, ACT_DIM)

    q_ref = _ref_critic(state, action, critic_p)
    mu_ref = _ref_actor(state, actor_p)

    np.testing.assert_allclose(np.asarray(q_out), np.asarray(q_ref),
                               rtol=2e-5, atol=2e-5)
    np.testing.assert_allclose(np.asarray(mu_out), np.asarray(mu_ref),
                               rtol=2e-5, atol=2e-5)
    np.testing.assert_allclose(np.asarray(q_fused), np.asarray(q_ref),
                               rtol=2e-5, atol=2e-5)
    np.testing.assert_allclose(np.asarray(mu_fused), np.asarray(mu_ref),
                               rtol=2e-5, atol=2e-5)

    print("KERNEL_OK")
</pallas_src>

<mosaic_0001>
module attributes {stable_mosaic.version = 11 : i64} {
  func.func @kernel(%arg0: i32, %arg1: memref<256x128xf32, #tpu.memory_space<vmem>>, %arg2: memref<272x256xf32, #tpu.memory_space<vmem>>, %arg3: memref<256x128xf32, #tpu.memory_space<vmem>>) attributes {dimension_semantics = [#tpu.dimension_semantics<parallel>], iteration_bounds = array<i64: 1>, scalar_prefetch = 0 : i64, scratch_operands = 0 : i64, tpu.core_type = #tpu.core_type<tc>, window_params = [{transform_indices = @transform_0, window_bounds = array<i64: 256, 128>}, {pipeline_mode = #tpu.pipeline_mode<synchronous>, transform_indices = @transform_1, window_bounds = array<i64: 272, 256>}, {transform_indices = @transform_2, window_bounds = array<i64: 256, 128>}]} {
    %c0 = arith.constant 0 : index
    %c0_0 = arith.constant 0 : index
    %0 = vector.load %arg1[%c0, %c0_0] : memref<256x128xf32, #tpu.memory_space<vmem>>, vector<256x128xf32>
    %c0_1 = arith.constant 0 : index
    %c0_2 = arith.constant 0 : index
    %1 = vector.load %arg2[%c0_1, %c0_2] : memref<272x256xf32, #tpu.memory_space<vmem>>, vector<128x256xf32>
    %c128 = arith.constant 128 : index
    %c0_3 = arith.constant 0 : index
    %2 = vector.load %arg2[%c128, %c0_3] : memref<272x256xf32, #tpu.memory_space<vmem>>, vector<128x128xf32>
    %c256 = arith.constant 256 : index
    %c0_4 = arith.constant 0 : index
    %3 = vector.load %arg2[%c256, %c0_4] : memref<272x256xf32, #tpu.memory_space<vmem>>, vector<16x256xf32>
    %cst = arith.constant dense<0.000000e+00> : vector<256x256xf32>
    %4 = tpu.matmul %0, %1, %cst {dimension_numbers = #tpu.dot_dimension_numbers<[1], [0], [0], [1], [0, 0, 1, 1], [], []>} : vector<256x128xf32>, vector<128x256xf32>, vector<256x256xf32> -> vector<256x256xf32>
    %5 = vector.extract_strided_slice %4 {offsets = [0, 0], sizes = [256, 128], strides = [1, 1]} : vector<256x256xf32> to vector<256x128xf32>
    %6 = vector.extract_strided_slice %4 {offsets = [0, 128], sizes = [256, 128], strides = [1, 1]} : vector<256x256xf32> to vector<256x128xf32>
    %7 = vector.extract_strided_slice %3 {offsets = [0, 0], sizes = [1, 128], strides = [1, 1]} : vector<16x256xf32> to vector<1x128xf32>
    %8 = vector.broadcast %7 : vector<1x128xf32> to vector<256x128xf32>
    %9 = arith.addf %5, %8 : vector<256x128xf32>
    %10 = vector.extract_strided_slice %3 {offsets = [1, 0], sizes = [1, 128], strides = [1, 1]} : vector<16x256xf32> to vector<1x128xf32>
    %11 = vector.extract_strided_slice %3 {offsets = [2, 0], sizes = [1, 128], strides = [1, 1]} : vector<16x256xf32> to vector<1x128xf32>
    %cst_5 = arith.constant dense<0.000000e+00> : vector<256xf32>
    %12 = vector.multi_reduction <add>, %9, %cst_5 [1] : vector<256x128xf32> to vector<256xf32>
    %13 = vector.shape_cast %12 : vector<256xf32> to vector<256x1xf32>
    %cst_6 = arith.constant 3.125000e-02 : f32
    %14 = vector.broadcast %cst_6 : f32 to vector<256x1xf32>
    %15 = arith.mulf %13, %14 : vector<256x1xf32>
    %16 = arith.mulf %9, %9 : vector<256x128xf32>
    %cst_7 = arith.constant dense<0.000000e+00> : vector<256xf32>
    %17 = vector.multi_reduction <add>, %16, %cst_7 [1] : vector<256x128xf32> to vector<256xf32>
    %18 = vector.shape_cast %17 : vector<256xf32> to vector<256x1xf32>
    %cst_8 = arith.constant 3.125000e-02 : f32
    %19 = vector.broadcast %cst_8 : f32 to vector<256x1xf32>
    %20 = arith.mulf %18, %19 : vector<256x1xf32>
    %21 = arith.mulf %15, %15 : vector<256x1xf32>
    %22 = arith.subf %20, %21 : vector<256x1xf32>
    %23 = vector.broadcast %15 : vector<256x1xf32> to vector<256x128xf32>
    %24 = arith.subf %9, %23 : vector<256x128xf32>
    %cst_9 = arith.constant 9.99999974E-6 : f32
    %25 = vector.broadcast %cst_9 : f32 to vector<256x1xf32>
    %26 = arith.addf %22, %25 : vector<256x1xf32>
    %27 = math.rsqrt %26 : vector<256x1xf32>
    %28 = vector.broadcast %27 : vector<256x1xf32> to vector<256x128xf32>
    %29 = arith.mulf %24, %28 : vector<256x128xf32>
    %30 = vector.broadcast %10 : vector<1x128xf32> to vector<256x128xf32>
    %31 = arith.mulf %29, %30 : vector<256x128xf32>
    %32 = vector.broadcast %11 : vector<1x128xf32> to vector<256x128xf32>
    %33 = arith.addf %31, %32 : vector<256x128xf32>
    %cst_10 = arith.constant 0.000000e+00 : f32
    %34 = vector.broadcast %cst_10 : f32 to vector<256x128xf32>
    %35 = arith.maximumf %33, %34 : vector<256x128xf32>
    %cst_11 = arith.constant dense<0.000000e+00> : vector<256x128xf32>
    %36 = tpu.matmul %35, %2, %cst_11 {dimension_numbers = #tpu.dot_dimension_numbers<[1], [0], [0], [1], [0, 0, 1, 1], [], []>} : vector<256x128xf32>, vector<128x128xf32>, vector<256x128xf32> -> vector<256x128xf32>
    %37 = vector.extract_strided_slice %3 {offsets = [3, 0], sizes = [1, 128], strides = [1, 1]} : vector<16x256xf32> to vector<1x128xf32>
    %38 = vector.broadcast %37 : vector<1x128xf32> to vector<256x128xf32>
    %39 = arith.addf %36, %38 : vector<256x128xf32>
    %40 = vector.extract_strided_slice %3 {offsets = [4, 0], sizes = [1, 128], strides = [1, 1]} : vector<16x256xf32> to vector<1x128xf32>
    %41 = vector.extract_strided_slice %3 {offsets = [5, 0], sizes = [1, 128], strides = [1, 1]} : vector<16x256xf32> to vector<1x128xf32>
    %cst_12 = arith.constant dense<0.000000e+00> : vector<256xf32>
    %42 = vector.multi_reduction <add>, %39, %cst_12 [1] : vector<256x128xf32> to vector<256xf32>
    %43 = vector.shape_cast %42 : vector<256xf32> to vector<256x1xf32>
    %cst_13 = arith.constant 3.125000e-02 : f32
    %44 = vector.broadcast %cst_13 : f32 to vector<256x1xf32>
    %45 = arith.mulf %43, %44 : vector<256x1xf32>
    %46 = arith.mulf %39, %39 : vector<256x128xf32>
    %cst_14 = arith.constant dense<0.000000e+00> : vector<256xf32>
    %47 = vector.multi_reduction <add>, %46, %cst_14 [1] : vector<256x128xf32> to vector<256xf32>
    %48 = vector.shape_cast %47 : vector<256xf32> to vector<256x1xf32>
    %cst_15 = arith.constant 3.125000e-02 : f32
    %49 = vector.broadcast %cst_15 : f32 to vector<256x1xf32>
    %50 = arith.mulf %48, %49 : vector<256x1xf32>
    %51 = arith.mulf %45, %45 : vector<256x1xf32>
    %52 = arith.subf %50, %51 : vector<256x1xf32>
    %53 = vector.broadcast %45 : vector<256x1xf32> to vector<256x128xf32>
    %54 = arith.subf %39, %53 : vector<256x128xf32>
    %cst_16 = arith.constant 9.99999974E-6 : f32
    %55 = vector.broadcast %cst_16 : f32 to vector<256x1xf32>
    %56 = arith.addf %52, %55 : vector<256x1xf32>
    %57 = math.rsqrt %56 : vector<256x1xf32>
    %58 = vector.broadcast %57 : vector<256x1xf32> to vector<256x128xf32>
    %59 = arith.mulf %54, %58 : vector<256x128xf32>
    %60 = vector.broadcast %40 : vector<1x128xf32> to vector<256x128xf32>
    %61 = arith.mulf %59, %60 : vector<256x128xf32>
    %62 = vector.broadcast %41 : vector<1x128xf32> to vector<256x128xf32>
    %63 = arith.addf %61, %62 : vector<256x128xf32>
    %64 = vector.extract_strided_slice %3 {offsets = [6, 0], sizes = [1, 128], strides = [1, 1]} : vector<16x256xf32> to vector<1x128xf32>
    %65 = vector.broadcast %64 : vector<1x128xf32> to vector<256x128xf32>
    %66 = arith.addf %6, %65 : vector<256x128xf32>
    %cst_17 = arith.constant 0.000000e+00 : f32
    %67 = vector.broadcast %cst_17 : f32 to vector<256x128xf32>
    %68 = arith.maximumf %66, %67 : vector<256x128xf32>
    %69 = arith.addf %63, %68 : vector<256x128xf32>
    %cst_18 = arith.constant 0.000000e+00 : f32
    %70 = vector.broadcast %cst_18 : f32 to vector<256x128xf32>
    %71 = arith.maximumf %69, %70 : vector<256x128xf32>
    %72 = vector.extract_strided_slice %3 {offsets = [7, 0], sizes = [1, 128], strides = [1, 1]} : vector<16x256xf32> to vector<1x128xf32>
    %73 = vector.extract_strided_slice %3 {offsets = [8, 0], sizes = [1, 1], strides = [1, 1]} : vector<16x256xf32> to vector<1x1xf32>
    %74 = vector.broadcast %72 : vector<1x128xf32> to vector<256x128xf32>
    %75 = arith.mulf %71, %74 : vector<256x128xf32>
    %cst_19 = arith.constant dense<0.000000e+00> : vector<256xf32>
    %76 = vector.multi_reduction <add>, %75, %cst_19 [1] : vector<256x128xf32> to vector<256xf32>
    %77 = vector.shape_cast %76 : vector<256xf32> to vector<256x1xf32>
    %78 = vector.broadcast %73 : vector<1x1xf32> to vector<256x1xf32>
    %79 = arith.addf %77, %78 : vector<256x1xf32>
    %80 = vector.shape_cast %79 : vector<256x1xf32> to vector<256x1xf32>
    %81 = vector.broadcast %80 : vector<256x1xf32> to vector<256x128xf32>
    %c0_20 = arith.constant 0 : index
    %c0_21 = arith.constant 0 : index
    %82 = vector.load %arg3[%c0_20, %c0_21] : memref<256x128xf32, #tpu.memory_space<vmem>>, vector<256x128xf32>
    tpu.vector_store %arg3[%c0_20, %c0_21], %81 {strides = array<i32>} : memref<256x128xf32, #tpu.memory_space<vmem>>, vector<256x128xf32>,
    return
  }
  func.func @transform_0(%arg0: i32) -> (i32, i32) {
    %c0_i32 = arith.constant 0 : i32
    %c0_i32_0 = arith.constant 0 : i32
    return %arg0, %c0_i32 : i32, i32
  }
  func.func @transform_1(%arg0: i32) -> (i32, i32) {
    %c0_i32 = arith.constant 0 : i32
    %c0_i32_0 = arith.constant 0 : i32
    %c0_i32_1 = arith.constant 0 : i32
    return %c0_i32, %c0_i32_0 : i32, i32
  }
  func.func @transform_2(%arg0: i32) -> (i32, i32) {
    %c0_i32 = arith.constant 0 : i32
    %c0_i32_0 = arith.constant 0 : i32
    return %arg0, %c0_i32 : i32, i32
  }
}

</mosaic_0001>

<llo_original>
// kernel: tpu_custom_call.1
$region0: #{tpu_custom_call.1}
  #allocation0 [shape = 'u32[]', space=smem, size = 0x4, offset = 0x4, fixed_abs, tag = 'smem constant byte address 0x4 - core index']
  #allocation1 [shape = 'u32[144,128]{1,0:T(1,128)}', space=vmem, size = 0x12000, scoped, tag = 'internal scratch']
  %s0 = inlined_call_operand.hbm [shape: f32[256,128], index: 0, kind: input, shape index: {}]
  %s1 = inlined_call_operand.hbm [shape: f32[272,256], index: 1, kind: input, shape index: {}]
  %s2 = inlined_call_operand.hbm [shape: f32[256,128], index: 2, kind: output, shape index: {}]
  %s3 = sld [smem:[#allocation0]]
  $region26: #{tpu_custom_call.1} parent=0
    _
  %s5 = ssub.s32 1, %s3
  %s6 = scalar_select 0, %s5, %s3
  $region1: #{tpu_custom_call.1} parent=0
    #allocation2 [shape = 'u8[131072]{0}', space=vmem, size = 0x20000, scoped, tag = 'input window, operand 0, single buffered']
    #allocation3 [shape = 's32[1]{0}', space=sflag, size = 0x4, scoped, tag = 'scoped memory for tpu_custom_call.1']
    #allocation4 [shape = 's32[1]{0}', space=sflag, size = 0x4, scoped, tag = 'scoped memory for tpu_custom_call.1']
    #allocation5 [shape = 'u8[278528]{0}', space=vmem, size = 0x44000, scoped, tag = 'input window, operand 1, single buffered']
    #allocation6 [shape = 's32[1]{0}', space=sflag, size = 0x4, scoped, tag = 'scoped memory for tpu_custom_call.1']
    #allocation7 [shape = 'u8[131072]{0}', space=vmem, size = 0x20000, scoped, tag = 'output window, operand 0, single buffered']
    %7 = vsyncpa [#allocation3], 0
    %8 = vsyncpa [#allocation6], 0
    %9 = vsyncpa [#allocation4], 0
    // Predicated region
    $region2: #{tpu_custom_call.1} parent=1 // pred_check
      _
    $region3: #{tpu_custom_call.1} parent=1 // pred_check_branch
      %11 = sbr.rel (0) target = $region5
    $region4: #{tpu_custom_call.1} parent=1 // pred_region
      %s13 = ssub.s32 4096, 4096
      %14 = vsyncadd [#allocation3], %s13
      %s15 = sshll.u32 [#allocation2], 4
      %s16 = int_to_ptr.vmem [resolvable:$true] %s15
      %21 = dma.hbm_to_vmem [thread:$0]  %s0, 4096, %s16, [#allocation3], 128, 128, 8
    $region5: #{tpu_custom_call.1} parent=1 // pred_fallthru
      _
    // Predicated region
    $region6: #{tpu_custom_call.1} parent=1 // pred_check
      _
    $region7: #{tpu_custom_call.1} parent=1 // pred_check_branch
      %23 = sbr.rel (0) target = $region9
    $region8: #{tpu_custom_call.1} parent=1 // pred_region
      %s25 = ssub.s32 8704, 8704
      %26 = vsyncadd [#allocation6], %s25
      %s27 = sshll.u32 [#allocation5], 4
      %s28 = int_to_ptr.vmem [resolvable:$true] %s27
      %33 = dma.hbm_to_vmem [thread:$0]  %s1, 8704, %s28, [#allocation6], 256, 256, 16
    $region9: #{tpu_custom_call.1} parent=1 // pred_fallthru
      _
    // Predicated region
    $region10: #{tpu_custom_call.1} parent=1 // pred_check
      _
    $region11: #{tpu_custom_call.1} parent=1 // pred_check_branch
      %35 = sbr.rel (0) target = $region13
    $region12: #{tpu_custom_call.1} parent=1 // pred_region
      %36 = dma.done [#allocation3], 4096
    $region13: #{tpu_custom_call.1} parent=1 // pred_fallthru
      _
    // Predicated region
    $region14: #{tpu_custom_call.1} parent=1 // pred_check
      _
    $region15: #{tpu_custom_call.1} parent=1 // pred_check_branch
      %38 = sbr.rel (0) target = $region17
    $region16: #{tpu_custom_call.1} parent=1 // pred_region
      %39 = dma.done [#allocation6], 8704
    $region17: #{tpu_custom_call.1} parent=1 // pred_fallthru
      _
    %v40 = vld [vmem:[#allocation2] sm:$0xff]
    %v41 = vld [vmem:[#allocation2 + $0x8] sm:$0xff]
    %v42 = vld [vmem:[#allocation2 + $0x10] sm:$0xff]
    %v43 = vld [vmem:[#allocation2 + $0x18] sm:$0xff]
    %v44 = vld [vmem:[#allocation2 + $0x20] sm:$0xff]
    %v45 = vld [vmem:[#allocation2 + $0x28] sm:$0xff]
    %v46 = vld [vmem:[#allocation2 + $0x30] sm:$0xff]
    %v47 = vld [vmem:[#allocation2 + $0x38] sm:$0xff]
    %v48 = vld [vmem:[#allocation2 + $0x40] sm:$0xff]
    %v49 = vld [vmem:[#allocation2 + $0x48] sm:$0xff]
    %v50 = vld [vmem:[#allocation2 + $0x50] sm:$0xff]
    %v51 = vld [vmem:[#allocation2 + $0x58] sm:$0xff]
    %v52 = vld [vmem:[#allocation2 + $0x60] sm:$0xff]
    %v53 = vld [vmem:[#allocation2 + $0x68] sm:$0xff]
    %v54 = vld [vmem:[#allocation2 + $0x70] sm:$0xff]
    %v55 = vld [vmem:[#allocation2 + $0x78] sm:$0xff]
    %v56 = vld [vmem:[#allocation2 + $0x80] sm:$0xff]
    %v57 = vld [vmem:[#allocation2 + $0x88] sm:$0xff]
    %v58 = vld [vmem:[#allocation2 + $0x90] sm:$0xff]
    %v59 = vld [vmem:[#allocation2 + $0x98] sm:$0xff]
    %v60 = vld [vmem:[#allocation2 + $0xa0] sm:$0xff]
    %v61 = vld [vmem:[#allocation2 + $0xa8] sm:$0xff]
    %v62 = vld [vmem:[#allocation2 + $0xb0] sm:$0xff]
    %v63 = vld [vmem:[#allocation2 + $0xb8] sm:$0xff]
    %v64 = vld [vmem:[#allocation2 + $0xc0] sm:$0xff]
    %v65 = vld [vmem:[#allocation2 + $0xc8] sm:$0xff]
    %v66 = vld [vmem:[#allocation2 + $0xd0] sm:$0xff]
    %v67 = vld [vmem:[#allocation2 + $0xd8] sm:$0xff]
    %v68 = vld [vmem:[#allocation2 + $0xe0] sm:$0xff]
    %v69 = vld [vmem:[#allocation2 + $0xe8] sm:$0xff]
    %v70 = vld [vmem:[#allocation2 + $0xf0] sm:$0xff]
    %v71 = vld [vmem:[#allocation2 + $0xf8] sm:$0xff]
    %v72 = vld [vmem:[#allocation5] sm:$0xff]
    %v73 = vld [vmem:[#allocation5 + $0x8] sm:$0xff]
    %v74 = vld [vmem:[#allocation5 + $0x10] sm:$0xff]
    %v75 = vld [vmem:[#allocation5 + $0x18] sm:$0xff]
    %v76 = vld [vmem:[#allocation5 + $0x20] sm:$0xff]
    %v77 = vld [vmem:[#allocation5 + $0x28] sm:$0xff]
    %v78 = vld [vmem:[#allocation5 + $0x30] sm:$0xff]
    %v79 = vld [vmem:[#allocation5 + $0x38] sm:$0xff]
    %v80 = vld [vmem:[#allocation5 + $0x40] sm:$0xff]
    %v81 = vld [vmem:[#allocation5 + $0x48] sm:$0xff]
    %v82 = vld [vmem:[#allocation5 + $0x50] sm:$0xff]
    %v83 = vld [vmem:[#allocation5 + $0x58] sm:$0xff]
    %v84 = vld [vmem:[#allocation5 + $0x60] sm:$0xff]
    %v85 = vld [vmem:[#allocation5 + $0x68] sm:$0xff]
    %v86 = vld [vmem:[#allocation5 + $0x70] sm:$0xff]
    %v87 = vld [vmem:[#allocation5 + $0x78] sm:$0xff]
    %v88 = vld [vmem:[#allocation5 + $0x80] sm:$0xff]
    %v89 = vld [vmem:[#allocation5 + $0x88] sm:$0xff]
    %v90 = vld [vmem:[#allocation5 + $0x90] sm:$0xff]
    %v91 = vld [vmem:[#allocation5 + $0x98] sm:$0xff]
    %v92 = vld [vmem:[#allocation5 + $0xa0] sm:$0xff]
    %v93 = vld [vmem:[#allocation5 + $0xa8] sm:$0xff]
    %v94 = vld [vmem:[#allocation5 + $0xb0] sm:$0xff]
    %v95 = vld [vmem:[#allocation5 + $0xb8] sm:$0xff]
    %v96 = vld [vmem:[#allocation5 + $0xc0] sm:$0xff]
    %v97 = vld [vmem:[#allocation5 + $0xc8] sm:$0xff]
    %v98 = vld [vmem:[#allocation5 + $0xd0] sm:$0xff]
    %v99 = vld [vmem:[#allocation5 + $0xd8] sm:$0xff]
    %v100 = vld [vmem:[#allocation5 + $0xe0] sm:$0xff]
    %v101 = vld [vmem:[#allocation5 + $0xe8] sm:$0xff]
    %v102 = vld [vmem:[#allocation5 + $0xf0] sm:$0xff]
    %v103 = vld [vmem:[#allocation5 + $0xf8] sm:$0xff]
    %v104 = vld [vmem:[#allocation5 + $0x100] sm:$0xff]
    %v105 = vld [vmem:[#allocation5 + $0x110] sm:$0xff]
    %v106 = vld [vmem:[#allocation5 + $0x120] sm:$0xff]
    %v107 = vld [vmem:[#allocation5 + $0x130] sm:$0xff]
    %v108 = vld [vmem:[#allocation5 + $0x140] sm:$0xff]
    %v109 = vld [vmem:[#allocation5 + $0x150] sm:$0xff]
    %v110 = vld [vmem:[#allocation5 + $0x160] sm:$0xff]
    %v111 = vld [vmem:[#allocation5 + $0x170] sm:$0xff]
    %v112 = vld [vmem:[#allocation5 + $0x180] sm:$0xff]
    %v113 = vld [vmem:[#allocation5 + $0x190] sm:$0xff]
    %v114 = vld [vmem:[#allocation5 + $0x1a0] sm:$0xff]
    %v115 = vld [vmem:[#allocation5 + $0x1b0] sm:$0xff]
    %v116 = vld [vmem:[#allocation5 + $0x1c0] sm:$0xff]
    %v117 = vld [vmem:[#allocation5 + $0x1d0] sm:$0xff]
    %v118 = vld [vmem:[#allocation5 + $0x1e0] sm:$0xff]
    %v119 = vld [vmem:[#allocation5 + $0x1f0] sm:$0xff]
    %v120 = vld [vmem:[#allocation5 + $0x200] sm:$0xff]
    %v121 = vld [vmem:[#allocation5 + $0x210] sm:$0xff]
    %122 = vmatprep.subr.mxu0 %v73
    %123 = vmatpush1.msra.mxu0 %v72
    %124 = vmatprep.subr.mxu0 %v75
    %125 = vmatpush1.msra.mxu0 %v74
    %126 = vmatprep.subr.mxu0 %v77
    %127 = vmatpush1.msra.mxu0 %v76
    %128 = vmatprep.subr.mxu0 %v79
    %129 = vmatpush1.msra.mxu0 %v78
    %130 = vmatprep.subr.mxu0 %v81
    %131 = vmatpush1.msra.mxu0 %v80
    %132 = vmatprep.subr.mxu0 %v83
    %133 = vmatpush1.msra.mxu0 %v82
    %134 = vmatprep.subr.mxu0 %v85
    %135 = vmatpush1.msra.mxu0 %v84
    %136 = vmatprep.subr.mxu0 %v87
    %137 = vmatpush1.msra.mxu0 %v86
    %138 = vmatprep.subr.mxu0 %v89
    %139 = vmatpush1.msra.mxu0 %v88
    %140 = vmatprep.subr.mxu0 %v91
    %141 = vmatpush1.msra.mxu0 %v90
    %142 = vmatprep.subr.mxu0 %v93
    %143 = vmatpush1.msra.mxu0 %v92
    %144 = vmatprep.subr.mxu0 %v95
    %145 = vmatpush1.msra.mxu0 %v94
    %146 = vmatprep.subr.mxu0 %v97
    %147 = vmatpush1.msra.mxu0 %v96
    %148 = vmatprep.subr.mxu0 %v99
    %149 = vmatpush1.msra.mxu0 %v98
    %150 = vmatprep.subr.mxu0 %v101
    %151 = vmatpush1.msra.mxu0 %v100
    %152 = vmatprep.subr.mxu0 %v103
    %153 = vmatpush1.msra.mxu0 %v102
    %154 = vmatprep.subr.mxu0 0.0
    %155 = vmatpush1.msra.mxu0 0.0
    %156 = vmatprep.subr.mxu0 0.0
    %157 = vmatpush1.msra.mxu0 0.0
    %158 = vmatprep.subr.mxu0 0.0
    %159 = vmatpush1.msra.mxu0 0.0
    %160 = vmatprep.subr.mxu0 0.0
    %161 = vmatpush1.msra.mxu0 0.0
    %162 = vmatprep.subr.mxu0 0.0
    %163 = vmatpush1.msra.mxu0 0.0
    %164 = vmatprep.subr.mxu0 0.0
    %165 = vmatpush1.msra.mxu0 0.0
    %166 = vmatprep.subr.mxu0 0.0
    %167 = vmatpush1.msra.mxu0 0.0
    %168 = vmatprep.subr.mxu0 0.0
    %169 = vmatpush1.msra.mxu0 0.0
    %170 = vmatprep.subr.mxu0 0.0
    %171 = vmatpush1.msra.mxu0 0.0
    %172 = vmatprep.subr.mxu0 0.0
    %173 = vmatpush1.msra.mxu0 0.0
    %174 = vmatprep.subr.mxu0 0.0
    %175 = vmatpush1.msra.mxu0 0.0
    %176 = vmatprep.subr.mxu0 0.0
    %177 = vmatpush1.msra.mxu0 0.0
    %178 = vmatprep.subr.mxu0 0.0
    %179 = vmatpush1.msra.mxu0 0.0
    %180 = vmatprep.subr.mxu0 0.0
    %181 = vmatpush1.msra.mxu0 0.0
    %182 = vmatprep.subr.mxu0 0.0
    %183 = vmatpush1.msra.mxu0 0.0
    %184 = vmatprep.subr.mxu0 0.0
    %185 = vmatpush1.msra.mxu0 0.0
    %186 = vmatprep.mubr.f32.mxu0 0.0
    %187 = vmatmul.mubr.f32.gmra.mrb[0].mxu0 %v40
    %v188 = vpop.f32.mrb[0].mxu0
    %v189 = vadd.f32 0.0, %v188
    %v190 = vpop.f32.mrb[0].mxu0
    %v191 = vadd.f32 0.0, %v190
    %192 = vmatprep.mubr.f32.mxu0 0.0
    %193 = vmatmul.mubr.f32.gmra.mrb[0].mxu0 %v41
    %v194 = vpop.f32.mrb[0].mxu0
    %v195 = vadd.f32 0.0, %v194
    %v196 = vpop.f32.mrb[0].mxu0
    %v197 = vadd.f32 0.0, %v196
    %198 = vmatprep.mubr.f32.mxu0 0.0
    %199 = vmatmul.mubr.f32.gmra.mrb[0].mxu0 %v42
    %v200 = vpop.f32.mrb[0].mxu0
    %v201 = vadd.f32 0.0, %v200
    %v202 = vpop.f32.mrb[0].mxu0
    %v203 = vadd.f32 0.0, %v202
    %204 = vmatprep.mubr.f32.mxu0 0.0
    %205 = vmatmul.mubr.f32.gmra.mrb[0].mxu0 %v43
    %v206 = vpop.f32.mrb[0].mxu0
    %v207 = vadd.f32 0.0, %v206
    %v208 = vpop.f32.mrb[0].mxu0
    %v209 = vadd.f32 0.0, %v208
    %210 = vmatprep.mubr.f32.mxu0 0.0
    %211 = vmatmul.mubr.f32.gmra.mrb[0].mxu0 %v44
    %v212 = vpop.f32.mrb[0].mxu0
    %v213 = vadd.f32 0.0, %v212
    %v214 = vpop.f32.mrb[0].mxu0
    %v215 = vadd.f32 0.0, %v214
    %216 = vmatprep.mubr.f32.mxu0 0.0
    %217 = vmatmul.mubr.f32.gmra.mrb[0].mxu0 %v45
    %v218 = vpop.f32.mrb[0].mxu0
    %v219 = vadd.f32 0.0, %v218
    %v220 = vpop.f32.mrb[0].mxu0
    %v221 = vadd.f32 0.0, %v220
    %222 = vmatprep.mubr.f32.mxu0 0.0
    %223 = vmatmul.mubr.f32.gmra.mrb[0].mxu0 %v46
    %v224 = vpop.f32.mrb[0].mxu0
    %v225 = vadd.f32 0.0, %v224
    %v226 = vpop.f32.mrb[0].mxu0
    %v227 = vadd.f32 0.0, %v226
    %228 = vmatprep.mubr.f32.mxu0 0.0
    %229 = vmatmul.mubr.f32.gmra.mrb[0].mxu0 %v47
    %v230 = vpop.f32.mrb[0].mxu0
    %v231 = vadd.f32 0.0, %v230
    %v232 = vpop.f32.mrb[0].mxu0
    %v233 = vadd.f32 0.0, %v232
    %234 = vmatprep.mubr.f32.mxu0 0.0
    %235 = vmatmul.mubr.f32.gmra.mrb[0].mxu0 %v48
    %v236 = vpop.f32.mrb[0].mxu0
    %v237 = vadd.f32 0.0, %v236
    %v238 = vpop.f32.mrb[0].mxu0
    %v239 = vadd.f32 0.0, %v238
    %240 = vmatprep.mubr.f32.mxu0 0.0
    %241 = vmatmul.mubr.f32.gmra.mrb[0].mxu0 %v49
    %v242 = vpop.f32.mrb[0].mxu0
    %v243 = vadd.f32 0.0, %v242
    %v244 = vpop.f32.mrb[0].mxu0
    %v245 = vadd.f32 0.0, %v244
    %246 = vmatprep.mubr.f32.mxu0 0.0
    %247 = vmatmul.mubr.f32.gmra.mrb[0].mxu0 %v50
    %v248 = vpop.f32.mrb[0].mxu0
    %v249 = vadd.f32 0.0, %v248
    %v250 = vpop.f32.mrb[0].mxu0
    %v251 = vadd.f32 0.0, %v250
    %252 = vmatprep.mubr.f32.mxu0 0.0
    %253 = vmatmul.mubr.f32.gmra.mrb[0].mxu0 %v51
    %v254 = vpop.f32.mrb[0].mxu0
    %v255 = vadd.f32 0.0, %v254
    %v256 = vpop.f32.mrb[0].mxu0
    %v257 = vadd.f32 0.0, %v256
    %258 = vmatprep.mubr.f32.mxu0 0.0
    %259 = vmatmul.mubr.f32.gmra.mrb[0].mxu0 %v52
    %v260 = vpop.f32.mrb[0].mxu0
    %v261 = vadd.f32 0.0, %v260
    %v262 = vpop.f32.mrb[0].mxu0
    %v263 = vadd.f32 0.0, %v262
    %264 = vmatprep.mubr.f32.mxu0 0.0
    %265 = vmatmul.mubr.f32.gmra.mrb[0].mxu0 %v53
    %v266 = vpop.f32.mrb[0].mxu0
    %v267 = vadd.f32 0.0, %v266
    %v268 = vpop.f32.mrb[0].mxu0
    %v269 = vadd.f32 0.0, %v268
    %270 = vmatprep.mubr.f32.mxu0 0.0
    %271 = vmatmul.mubr.f32.gmra.mrb[0].mxu0 %v54
    %v272 = vpop.f32.mrb[0].mxu0
    %v273 = vadd.f32 0.0, %v272
    %v274 = vpop.f32.mrb[0].mxu0
    %v275 = vadd.f32 0.0, %v274
    %276 = vmatprep.mubr.f32.mxu0 0.0
    %277 = vmatmul.mubr.f32.gmra.mrb[0].mxu0 %v55
    %v278 = vpop.f32.mrb[0].mxu0
    %v279 = vadd.f32 0.0, %v278
    %v280 = vpop.f32.mrb[0].mxu0
    %v281 = vadd.f32 0.0, %v280
    %282 = vmatprep.mubr.f32.mxu0 0.0
    %283 = vmatmul.mubr.f32.gmra.mrb[0].mxu0 %v56
    %v284 = vpop.f32.mrb[0].mxu0
    %v285 = vadd.f32 0.0, %v284
    %v286 = vpop.f32.mrb[0].mxu0
    %v287 = vadd.f32 0.0, %v286
    %288 = vmatprep.mubr.f32.mxu0 0.0
    %289 = vmatmul.mubr.f32.gmra.mrb[0].mxu0 %v57
    %v290 = vpop.f32.mrb[0].mxu0
    %v291 = vadd.f32 0.0, %v290
    %v292 = vpop.f32.mrb[0].mxu0
    %v293 = vadd.f32 0.0, %v292
    %294 = vmatprep.mubr.f32.mxu0 0.0
    %295 = vmatmul.mubr.f32.gmra.mrb[0].mxu0 %v58
    %v296 = vpop.f32.mrb[0].mxu0
    %v297 = vadd.f32 0.0, %v296
    %v298 = vpop.f32.mrb[0].mxu0
    %v299 = vadd.f32 0.0, %v298
    %300 = vmatprep.mubr.f32.mxu0 0.0
    %301 = vmatmul.mubr.f32.gmra.mrb[0].mxu0 %v59
    %v302 = vpop.f32.mrb[0].mxu0
    %v303 = vadd.f32 0.0, %v302
    %v304 = vpop.f32.mrb[0].mxu0
    %v305 = vadd.f32 0.0, %v304
    %306 = vmatprep.mubr.f32.mxu0 0.0
    %307 = vmatmul.mubr.f32.gmra.mrb[0].mxu0 %v60
    %v308 = vpop.f32.mrb[0].mxu0
    %v309 = vadd.f32 0.0, %v308
    %v310 = vpop.f32.mrb[0].mxu0
    %v311 = vadd.f32 0.0, %v310
    %312 = vmatprep.mubr.f32.mxu0 0.0
    %313 = vmatmul.mubr.f32.gmra.mrb[0].mxu0 %v61
    %v314 = vpop.f32.mrb[0].mxu0
    %v315 = vadd.f32 0.0, %v314
    %v316 = vpop.f32.mrb[0].mxu0
    %v317 = vadd.f32 0.0, %v316
    %318 = vmatprep.mubr.f32.mxu0 0.0
    %319 = vmatmul.mubr.f32.gmra.mrb[0].mxu0 %v62
    %v320 = vpop.f32.mrb[0].mxu0
    %v321 = vadd.f32 0.0, %v320
    %v322 = vpop.f32.mrb[0].mxu0
    %v323 = vadd.f32 0.0, %v322
    %324 = vmatprep.mubr.f32.mxu0 0.0
    %325 = vmatmul.mubr.f32.gmra.mrb[0].mxu0 %v63
    %v326 = vpop.f32.mrb[0].mxu0
    %v327 = vadd.f32 0.0, %v326
    %v328 = vpop.f32.mrb[0].mxu0
    %v329 = vadd.f32 0.0, %v328
    %330 = vmatprep.mubr.f32.mxu0 0.0
    %331 = vmatmul.mubr.f32.gmra.mrb[0].mxu0 %v64
    %v332 = vpop.f32.mrb[0].mxu0
    %v333 = vadd.f32 0.0, %v332
    %v334 = vpop.f32.mrb[0].mxu0
    %v335 = vadd.f32 0.0, %v334
    %336 = vmatprep.mubr.f32.mxu0 0.0
    %337 = vmatmul.mubr.f32.gmra.mrb[0].mxu0 %v65
    %v338 = vpop.f32.mrb[0].mxu0
    %v339 = vadd.f32 0.0, %v338
    %v340 = vpop.f32.mrb[0].mxu0
    %v341 = vadd.f32 0.0, %v340
    %342 = vmatprep.mubr.f32.mxu0 0.0
    %343 = vmatmul.mubr.f32.gmra.mrb[0].mxu0 %v66
    %v344 = vpop.f32.mrb[0].mxu0
    %v345 = vadd.f32 0.0, %v344
    %v346 = vpop.f32.mrb[0].mxu0
    %v347 = vadd.f32 0.0, %v346
    %348 = vmatprep.mubr.f32.mxu0 0.0
    %349 = vmatmul.mubr.f32.gmra.mrb[0].mxu0 %v67
    %v350 = vpop.f32.mrb[0].mxu0
    %v351 = vadd.f32 0.0, %v350
    %v352 = vpop.f32.mrb[0].mxu0
    %v353 = vadd.f32 0.0, %v352
    %354 = vmatprep.mubr.f32.mxu0 0.0
    %355 = vmatmul.mubr.f32.gmra.mrb[0].mxu0 %v68
    %v356 = vpop.f32.mrb[0].mxu0
    %v357 = vadd.f32 0.0, %v356
    %v358 = vpop.f32.mrb[0].mxu0
    %v359 = vadd.f32 0.0, %v358
    %360 = vmatprep.mubr.f32.mxu0 0.0
    %361 = vmatmul.mubr.f32.gmra.mrb[0].mxu0 %v69
    %v362 = vpop.f32.mrb[0].mxu0
    %v363 = vadd.f32 0.0, %v362
    %v364 = vpop.f32.mrb[0].mxu0
    %v365 = vadd.f32 0.0, %v364
    %366 = vmatprep.mubr.f32.mxu0 0.0
    %367 = vmatmul.mubr.f32.gmra.mrb[0].mxu0 %v70
    %v368 = vpop.f32.mrb[0].mxu0
    %v369 = vadd.f32 0.0, %v368
    %v370 = vpop.f32.mrb[0].mxu0
    %v371 = vadd.f32 0.0, %v370
    %372 = vmatprep.mubr.f32.mxu0 0.0
    %373 = vmatmul.mubr.f32.gmra.mrb[0].mxu0 %v71
    %v374 = vpop.f32.mrb[0].mxu0
    %v375 = vadd.f32 0.0, %v374
    %v376 = vpop.f32.mrb[0].mxu0
    %v377 = vadd.f32 0.0, %v376
    %378 = vdwg.mxu0
    %v379 = vlaneseq
    %v380 = vshrl.u32 %v379, 7
    %v381 = vsub.s32 0, %v380
    %v382 = vrot.slane %v120, %v381
    %v383 = vadd.f32 %v189, %v382
    %v384 = vadd.f32 %v195, %v382
    %v385 = vadd.f32 %v201, %v382
    %v386 = vadd.f32 %v207, %v382
    %v387 = vadd.f32 %v213, %v382
    %v388 = vadd.f32 %v219, %v382
    %v389 = vadd.f32 %v225, %v382
    %v390 = vadd.f32 %v231, %v382
    %v391 = vadd.f32 %v237, %v382
    %v392 = vadd.f32 %v243, %v382
    %v393 = vadd.f32 %v249, %v382
    %v394 = vadd.f32 %v255, %v382
    %v395 = vadd.f32 %v261, %v382
    %v396 = vadd.f32 %v267, %v382
    %v397 = vadd.f32 %v273, %v382
    %v398 = vadd.f32 %v279, %v382
    %v399 = vadd.f32 %v285, %v382
    %v400 = vadd.f32 %v291, %v382
    %v401 = vadd.f32 %v297, %v382
    %v402 = vadd.f32 %v303, %v382
    %v403 = vadd.f32 %v309, %v382
    %v404 = vadd.f32 %v315, %v382
    %v405 = vadd.f32 %v321, %v382
    %v406 = vadd.f32 %v327, %v382
    %v407 = vadd.f32 %v333, %v382
    %v408 = vadd.f32 %v339, %v382
    %v409 = vadd.f32 %v345, %v382
    %v410 = vadd.f32 %v351, %v382
    %v411 = vadd.f32 %v357, %v382
    %v412 = vadd.f32 %v363, %v382
    %v413 = vadd.f32 %v369, %v382
    %v414 = vadd.f32 %v375, %v382
    %415 = vadd.xlane.f32.xlu0 %v383
    %v416 = vpop.xlane.xlu0 %415
    %417 = vadd.xlane.f32.xlu0 %v384
    %v418 = vpop.xlane.xlu0 %417
    %419 = vadd.xlane.f32.xlu0 %v385
    %v420 = vpop.xlane.xlu0 %419
    %421 = vadd.xlane.f32.xlu0 %v386
    %v422 = vpop.xlane.xlu0 %421
    %423 = vadd.xlane.f32.xlu0 %v387
    %v424 = vpop.xlane.xlu0 %423
    %425 = vadd.xlane.f32.xlu0 %v388
    %v426 = vpop.xlane.xlu0 %425
    %427 = vadd.xlane.f32.xlu0 %v389
    %v428 = vpop.xlane.xlu0 %427
    %429 = vadd.xlane.f32.xlu0 %v390
    %v430 = vpop.xlane.xlu0 %429
    %431 = vadd.xlane.f32.xlu0 %v391
    %v432 = vpop.xlane.xlu0 %431
    %433 = vadd.xlane.f32.xlu0 %v392
    %v434 = vpop.xlane.xlu0 %433
    %435 = vadd.xlane.f32.xlu0 %v393
    %v436 = vpop.xlane.xlu0 %435
    %437 = vadd.xlane.f32.xlu0 %v394
    %v438 = vpop.xlane.xlu0 %437
    %439 = vadd.xlane.f32.xlu0 %v395
    %v440 = vpop.xlane.xlu0 %439
    %441 = vadd.xlane.f32.xlu0 %v396
    %v442 = vpop.xlane.xlu0 %441
    %443 = vadd.xlane.f32.xlu0 %v397
    %v444 = vpop.xlane.xlu0 %443
    %445 = vadd.xlane.f32.xlu0 %v398
    %v446 = vpop.xlane.xlu0 %445
    %447 = vadd.xlane.f32.xlu0 %v399
    %v448 = vpop.xlane.xlu0 %447
    %449 = vadd.xlane.f32.xlu0 %v400
    %v450 = vpop.xlane.xlu0 %449
    %451 = vadd.xlane.f32.xlu0 %v401
    %v452 = vpop.xlane.xlu0 %451
    %453 = vadd.xlane.f32.xlu0 %v402
    %v454 = vpop.xlane.xlu0 %453
    %455 = vadd.xlane.f32.xlu0 %v403
    %v456 = vpop.xlane.xlu0 %455
    %457 = vadd.xlane.f32.xlu0 %v404
    %v458 = vpop.xlane.xlu0 %457
    %459 = vadd.xlane.f32.xlu0 %v405
    %v460 = vpop.xlane.xlu0 %459
    %461 = vadd.xlane.f32.xlu0 %v406
    %v462 = vpop.xlane.xlu0 %461
    %463 = vadd.xlane.f32.xlu0 %v407
    %v464 = vpop.xlane.xlu0 %463
    %465 = vadd.xlane.f32.xlu0 %v408
    %v466 = vpop.xlane.xlu0 %465
    %467 = vadd.xlane.f32.xlu0 %v409
    %v468 = vpop.xlane.xlu0 %467
    %469 = vadd.xlane.f32.xlu0 %v410
    %v470 = vpop.xlane.xlu0 %469
    %471 = vadd.xlane.f32.xlu0 %v411
    %v472 = vpop.xlane.xlu0 %471
    %473 = vadd.xlane.f32.xlu0 %v412
    %v474 = vpop.xlane.xlu0 %473
    %475 = vadd.xlane.f32.xlu0 %v413
    %v476 = vpop.xlane.xlu0 %475
    %477 = vadd.xlane.f32.xlu0 %v414
    %v478 = vpop.xlane.xlu0 %477
    %v479 = vmul.f32 %v416, 0.03125
    %v480 = vmul.f32 %v418, 0.03125
    %v481 = vmul.f32 %v420, 0.03125
    %v482 = vmul.f32 %v422, 0.03125
    %v483 = vmul.f32 %v424, 0.03125
    %v484 = vmul.f32 %v426, 0.03125
    %v485 = vmul.f32 %v428, 0.03125
    %v486 = vmul.f32 %v430, 0.03125
    %v487 = vmul.f32 %v432, 0.03125
    %v488 = vmul.f32 %v434, 0.03125
    %v489 = vmul.f32 %v436, 0.03125
    %v490 = vmul.f32 %v438, 0.03125
    %v491 = vmul.f32 %v440, 0.03125
    %v492 = vmul.f32 %v442, 0.03125
    %v493 = vmul.f32 %v444, 0.03125
    %v494 = vmul.f32 %v446, 0.03125
    %v495 = vmul.f32 %v448, 0.03125
    %v496 = vmul.f32 %v450, 0.03125
    %v497 = vmul.f32 %v452, 0.03125
    %v498 = vmul.f32 %v454, 0.03125
    %v499 = vmul.f32 %v456, 0.03125
    %v500 = vmul.f32 %v458, 0.03125
    %v501 = vmul.f32 %v460, 0.03125
    %v502 = vmul.f32 %v462, 0.03125
    %v503 = vmul.f32 %v464, 0.03125
    %v504 = vmul.f32 %v466, 0.03125
    %v505 = vmul.f32 %v468, 0.03125
    %v506 = vmul.f32 %v470, 0.03125
    %v507 = vmul.f32 %v472, 0.03125
    %v508 = vmul.f32 %v474, 0.03125
    %v509 = vmul.f32 %v476, 0.03125
    %v510 = vmul.f32 %v478, 0.03125
    %v511 = vmul.f32 %v383, %v383
    %v512 = vmul.f32 %v384, %v384
    %v513 = vmul.f32 %v385, %v385
    %v514 = vmul.f32 %v386, %v386
    %v515 = vmul.f32 %v387, %v387
    %v516 = vmul.f32 %v388, %v388
    %v517 = vmul.f32 %v389, %v389
    %v518 = vmul.f32 %v390, %v390
    %v519 = vmul.f32 %v391, %v391
    %v520 = vmul.f32 %v392, %v392
    %v521 = vmul.f32 %v393, %v393
    %v522 = vmul.f32 %v394, %v394
    %v523 = vmul.f32 %v395, %v395
    %v524 = vmul.f32 %v396, %v396
    %v525 = vmul.f32 %v397, %v397
    %v526 = vmul.f32 %v398, %v398
    %v527 = vmul.f32 %v399, %v399
    %v528 = vmul.f32 %v400, %v400
    %v529 = vmul.f32 %v401, %v401
    %v530 = vmul.f32 %v402, %v402
    %v531 = vmul.f32 %v403, %v403
    %v532 = vmul.f32 %v404, %v404
    %v533 = vmul.f32 %v405, %v405
    %v534 = vmul.f32 %v406, %v406
    %v535 = vmul.f32 %v407, %v407
    %v536 = vmul.f32 %v408, %v408
    %v537 = vmul.f32 %v409, %v409
    %v538 = vmul.f32 %v410, %v410
    %v539 = vmul.f32 %v411, %v411
    %v540 = vmul.f32 %v412, %v412
    %v541 = vmul.f32 %v413, %v413
    %v542 = vmul.f32 %v414, %v414
    %543 = vadd.xlane.f32.xlu0 %v511
    %v544 = vpop.xlane.xlu0 %543
    %545 = vadd.xlane.f32.xlu0 %v512
    %v546 = vpop.xlane.xlu0 %545
    %547 = vadd.xlane.f32.xlu0 %v513
    %v548 = vpop.xlane.xlu0 %547
    %549 = vadd.xlane.f32.xlu0 %v514
    %v550 = vpop.xlane.xlu0 %549
    %551 = vadd.xlane.f32.xlu0 %v515
    %v552 = vpop.xlane.xlu0 %551
    %553 = vadd.xlane.f32.xlu0 %v516
    %v554 = vpop.xlane.xlu0 %553
    %555 = vadd.xlane.f32.xlu0 %v517
    %v556 = vpop.xlane.xlu0 %555
    %557 = vadd.xlane.f32.xlu0 %v518
    %v558 = vpop.xlane.xlu0 %557
    %559 = vadd.xlane.f32.xlu0 %v519
    %v560 = vpop.xlane.xlu0 %559
    %561 = vadd.xlane.f32.xlu0 %v520
    %v562 = vpop.xlane.xlu0 %561
    %563 = vadd.xlane.f32.xlu0 %v521
    %v564 = vpop.xlane.xlu0 %563
    %565 = vadd.xlane.f32.xlu0 %v522
    %v566 = vpop.xlane.xlu0 %565
    %567 = vadd.xlane.f32.xlu0 %v523
    %v568 = vpop.xlane.xlu0 %567
    %569 = vadd.xlane.f32.xlu0 %v524
    %v570 = vpop.xlane.xlu0 %569
    %571 = vadd.xlane.f32.xlu0 %v525
    %v572 = vpop.xlane.xlu0 %571
    %573 = vadd.xlane.f32.xlu0 %v526
    %v574 = vpop.xlane.xlu0 %573
    %575 = vadd.xlane.f32.xlu0 %v527
    %v576 = vpop.xlane.xlu0 %575
    %577 = vadd.xlane.f32.xlu0 %v528
    %v578 = vpop.xlane.xlu0 %577
    %579 = vadd.xlane.f32.xlu0 %v529
    %v580 = vpop.xlane.xlu0 %579
    %581 = vadd.xlane.f32.xlu0 %v530
    %v582 = vpop.xlane.xlu0 %581
    %583 = vadd.xlane.f32.xlu0 %v531
    %v584 = vpop.xlane.xlu0 %583
    %585 = vadd.xlane.f32.xlu0 %v532
    %v586 = vpop.xlane.xlu0 %585
    %587 = vadd.xlane.f32.xlu0 %v533
    %v588 = vpop.xlane.xlu0 %587
    %589 = vadd.xlane.f32.xlu0 %v534
    %v590 = vpop.xlane.xlu0 %589
    %591 = vadd.xlane.f32.xlu0 %v535
    %v592 = vpop.xlane.xlu0 %591
    %593 = vadd.xlane.f32.xlu0 %v536
    %v594 = vpop.xlane.xlu0 %593
    %595 = vadd.xlane.f32.xlu0 %v537
    %v596 = vpop.xlane.xlu0 %595
    %597 = vadd.xlane.f32.xlu0 %v538
    %v598 = vpop.xlane.xlu0 %597
    %599 = vadd.xlane.f32.xlu0 %v539
    %v600 = vpop.xlane.xlu0 %599
    %601 = vadd.xlane.f32.xlu0 %v540
    %v602 = vpop.xlane.xlu0 %601
    %603 = vadd.xlane.f32.xlu0 %v541
    %v604 = vpop.xlane.xlu0 %603
    %605 = vadd.xlane.f32.xlu0 %v542
    %v606 = vpop.xlane.xlu0 %605
    %v607 = vmul.f32 %v544, 0.03125
    %v608 = vmul.f32 %v546, 0.03125
    %v609 = vmul.f32 %v548, 0.03125
    %v610 = vmul.f32 %v550, 0.03125
    %v611 = vmul.f32 %v552, 0.03125
    %v612 = vmul.f32 %v554, 0.03125
    %v613 = vmul.f32 %v556, 0.03125
    %v614 = vmul.f32 %v558, 0.03125
    %v615 = vmul.f32 %v560, 0.03125
    %v616 = vmul.f32 %v562, 0.03125
    %v617 = vmul.f32 %v564, 0.03125
    %v618 = vmul.f32 %v566, 0.03125
    %v619 = vmul.f32 %v568, 0.03125
    %v620 = vmul.f32 %v570, 0.03125
    %v621 = vmul.f32 %v572, 0.03125
    %v622 = vmul.f32 %v574, 0.03125
    %v623 = vmul.f32 %v576, 0.03125
    %v624 = vmul.f32 %v578, 0.03125
    %v625 = vmul.f32 %v580, 0.03125
    %v626 = vmul.f32 %v582, 0.03125
    %v627 = vmul.f32 %v584, 0.03125
    %v628 = vmul.f32 %v586, 0.03125
    %v629 = vmul.f32 %v588, 0.03125
    %v630 = vmul.f32 %v590, 0.03125
    %v631 = vmul.f32 %v592, 0.03125
    %v632 = vmul.f32 %v594, 0.03125
    %v633 = vmul.f32 %v596, 0.03125
    %v634 = vmul.f32 %v598, 0.03125
    %v635 = vmul.f32 %v600, 0.03125
    %v636 = vmul.f32 %v602, 0.03125
    %v637 = vmul.f32 %v604, 0.03125
    %v638 = vmul.f32 %v606, 0.03125
    %v639 = vmul.f32 %v479, %v479
    %v640 = vmul.f32 %v480, %v480
    %v641 = vmul.f32 %v481, %v481
    %v642 = vmul.f32 %v482, %v482
    %v643 = vmul.f32 %v483, %v483
    %v644 = vmul.f32 %v484, %v484
    %v645 = vmul.f32 %v485, %v485
    %v646 = vmul.f32 %v486, %v486
    %v647 = vmul.f32 %v487, %v487
    %v648 = vmul.f32 %v488, %v488
    %v649 = vmul.f32 %v489, %v489
    %v650 = vmul.f32 %v490, %v490
    %v651 = vmul.f32 %v491, %v491
    %v652 = vmul.f32 %v492, %v492
    %v653 = vmul.f32 %v493, %v493
    %v654 = vmul.f32 %v494, %v494
    %v655 = vmul.f32 %v495, %v495
    %v656 = vmul.f32 %v496, %v496
    %v657 = vmul.f32 %v497, %v497
    %v658 = vmul.f32 %v498, %v498
    %v659 = vmul.f32 %v499, %v499
    %v660 = vmul.f32 %v500, %v500
    %v661 = vmul.f32 %v501, %v501
    %v662 = vmul.f32 %v502, %v502
    %v663 = vmul.f32 %v503, %v503
    %v664 = vmul.f32 %v504, %v504
    %v665 = vmul.f32 %v505, %v505
    %v666 = vmul.f32 %v506, %v506
    %v667 = vmul.f32 %v507, %v507
    %v668 = vmul.f32 %v508, %v508
    %v669 = vmul.f32 %v509, %v509
    %v670 = vmul.f32 %v510, %v510
    %v671 = vsub.f32 %v607, %v639
    %v672 = vsub.f32 %v608, %v640
    %v673 = vsub.f32 %v609, %v641
    %v674 = vsub.f32 %v610, %v642
    %v675 = vsub.f32 %v611, %v643
    %v676 = vsub.f32 %v612, %v644
    %v677 = vsub.f32 %v613, %v645
    %v678 = vsub.f32 %v614, %v646
    %v679 = vsub.f32 %v615, %v647
    %v680 = vsub.f32 %v616, %v648
    %v681 = vsub.f32 %v617, %v649
    %v682 = vsub.f32 %v618, %v650
    %v683 = vsub.f32 %v619, %v651
    %v684 = vsub.f32 %v620, %v652
    %v685 = vsub.f32 %v621, %v653
    %v686 = vsub.f32 %v622, %v654
    %v687 = vsub.f32 %v623, %v655
    %v688 = vsub.f32 %v624, %v656
    %v689 = vsub.f32 %v625, %v657
    %v690 = vsub.f32 %v626, %v658
    %v691 = vsub.f32 %v627, %v659
    %v692 = vsub.f32 %v628, %v660
    %v693 = vsub.f32 %v629, %v661
    %v694 = vsub.f32 %v630, %v662
    %v695 = vsub.f32 %v631, %v663
    %v696 = vsub.f32 %v632, %v664
    %v697 = vsub.f32 %v633, %v665
    %v698 = vsub.f32 %v634, %v666
    %v699 = vsub.f32 %v635, %v667
    %v700 = vsub.f32 %v636, %v668
    %v701 = vsub.f32 %v637, %v669
    %v702 = vsub.f32 %v638, %v670
    %v703 = vsub.f32 %v383, %v479
    %v704 = vsub.f32 %v384, %v480
    %v705 = vsub.f32 %v385, %v481
    %v706 = vsub.f32 %v386, %v482
    %v707 = vsub.f32 %v387, %v483
    %v708 = vsub.f32 %v388, %v484
    %v709 = vsub.f32 %v389, %v485
    %v710 = vsub.f32 %v390, %v486
    %v711 = vsub.f32 %v391, %v487
    %v712 = vsub.f32 %v392, %v488
    %v713 = vsub.f32 %v393, %v489
    %v714 = vsub.f32 %v394, %v490
    %v715 = vsub.f32 %v395, %v491
    %v716 = vsub.f32 %v396, %v492
    %v717 = vsub.f32 %v397, %v493
    %v718 = vsub.f32 %v398, %v494
    %v719 = vsub.f32 %v399, %v495
    %v720 = vsub.f32 %v400, %v496
    %v721 = vsub.f32 %v401, %v497
    %v722 = vsub.f32 %v402, %v498
    %v723 = vsub.f32 %v403, %v499
    %v724 = vsub.f32 %v404, %v500
    %v725 = vsub.f32 %v405, %v501
    %v726 = vsub.f32 %v406, %v502
    %v727 = vsub.f32 %v407, %v503
    %v728 = vsub.f32 %v408, %v504
    %v729 = vsub.f32 %v409, %v505
    %v730 = vsub.f32 %v410, %v506
    %v731 = vsub.f32 %v411, %v507
    %v732 = vsub.f32 %v412, %v508
    %v733 = vsub.f32 %v413, %v509
    %v734 = vsub.f32 %v414, %v510
    %v735 = vadd.f32 %v671, 1e-05
    %v736 = vadd.f32 %v672, 1e-05
    %v737 = vadd.f32 %v673, 1e-05
    %v738 = vadd.f32 %v674, 1e-05
    %v739 = vadd.f32 %v675, 1e-05
    %v740 = vadd.f32 %v676, 1e-05
    %v741 = vadd.f32 %v677, 1e-05
    %v742 = vadd.f32 %v678, 1e-05
    %v743 = vadd.f32 %v679, 1e-05
    %v744 = vadd.f32 %v680, 1e-05
    %v745 = vadd.f32 %v681, 1e-05
    %v746 = vadd.f32 %v682, 1e-05
    %v747 = vadd.f32 %v683, 1e-05
    %v748 = vadd.f32 %v684, 1e-05
    %v749 = vadd.f32 %v685, 1e-05
    %v750 = vadd.f32 %v686, 1e-05
    %v751 = vadd.f32 %v687, 1e-05
    %v752 = vadd.f32 %v688, 1e-05
    %v753 = vadd.f32 %v689, 1e-05
    %v754 = vadd.f32 %v690, 1e-05
    %v755 = vadd.f32 %v691, 1e-05
    %v756 = vadd.f32 %v692, 1e-05
    %v757 = vadd.f32 %v693, 1e-05
    %v758 = vadd.f32 %v694, 1e-05
    %v759 = vadd.f32 %v695, 1e-05
    %v760 = vadd.f32 %v696, 1e-05
    %v761 = vadd.f32 %v697, 1e-05
    %v762 = vadd.f32 %v698, 1e-05
    %v763 = vadd.f32 %v699, 1e-05
    %v764 = vadd.f32 %v700, 1e-05
    %v765 = vadd.f32 %v701, 1e-05
    %v766 = vadd.f32 %v702, 1e-05
    %v767 = vrsqrt.pop %v735
    %v768 = vrsqrt.pop %v736
    %v769 = vrsqrt.pop %v737
    %v770 = vrsqrt.pop %v738
    %v771 = vrsqrt.pop %v739
    %v772 = vrsqrt.pop %v740
    %v773 = vrsqrt.pop %v741
    %v774 = vrsqrt.pop %v742
    %v775 = vrsqrt.pop %v743
    %v776 = vrsqrt.pop %v744
    %v777 = vrsqrt.pop %v745
    %v778 = vrsqrt.pop %v746
    %v779 = vrsqrt.pop %v747
    %v780 = vrsqrt.pop %v748
    %v781 = vrsqrt.pop %v749
    %v782 = vrsqrt.pop %v750
    %v783 = vrsqrt.pop %v751
    %v784 = vrsqrt.pop %v752
    %v785 = vrsqrt.pop %v753
    %v786 = vrsqrt.pop %v754
    %v787 = vrsqrt.pop %v755
    %v788 = vrsqrt.pop %v756
    %v789 = vrsqrt.pop %v757
    %v790 = vrsqrt.pop %v758
    %v791 = vrsqrt.pop %v759
    %v792 = vrsqrt.pop %v760
    %v793 = vrsqrt.pop %v761
    %v794 = vrsqrt.pop %v762
    %v795 = vrsqrt.pop %v763
    %v796 = vrsqrt.pop %v764
    %v797 = vrsqrt.pop %v765
    %v798 = vrsqrt.pop %v766
    %v799 = vmul.f32 %v703, %v767
    %v800 = vmul.f32 %v704, %v768
    %v801 = vmul.f32 %v705, %v769
    %v802 = vmul.f32 %v706, %v770
    %v803 = vmul.f32 %v707, %v771
    %v804 = vmul.f32 %v708, %v772
    %v805 = vmul.f32 %v709, %v773
    %v806 = vmul.f32 %v710, %v774
    %v807 = vmul.f32 %v711, %v775
    %v808 = vmul.f32 %v712, %v776
    %v809 = vmul.f32 %v713, %v777
    %v810 = vmul.f32 %v714, %v778
    %v811 = vmul.f32 %v715, %v779
    %v812 = vmul.f32 %v716, %v780
    %v813 = vmul.f32 %v717, %v781
    %v814 = vmul.f32 %v718, %v782
    %v815 = vmul.f32 %v719, %v783
    %v816 = vmul.f32 %v720, %v784
    %v817 = vmul.f32 %v721, %v785
    %v818 = vmul.f32 %v722, %v786
    %v819 = vmul.f32 %v723, %v787
    %v820 = vmul.f32 %v724, %v788
    %v821 = vmul.f32 %v725, %v789
    %v822 = vmul.f32 %v726, %v790
    %v823 = vmul.f32 %v727, %v791
    %v824 = vmul.f32 %v728, %v792
    %v825 = vmul.f32 %v729, %v793
    %v826 = vmul.f32 %v730, %v794
    %v827 = vmul.f32 %v731, %v795
    %v828 = vmul.f32 %v732, %v796
    %v829 = vmul.f32 %v733, %v797
    %v830 = vmul.f32 %v734, %v798
    %v831 = vlaneseq
    %v832 = vshrl.u32 %v831, 7
    %v833 = vsub.s32 1, %v832
    %v834 = vrot.slane %v120, %v833
    %v835 = vmul.f32 %v799, %v834
    %v836 = vmul.f32 %v800, %v834
    %v837 = vmul.f32 %v801, %v834
    %v838 = vmul.f32 %v802, %v834
    %v839 = vmul.f32 %v803, %v834
    %v840 = vmul.f32 %v804, %v834
    %v841 = vmul.f32 %v805, %v834
    %v842 = vmul.f32 %v806, %v834
    %v843 = vmul.f32 %v807, %v834
    %v844 = vmul.f32 %v808, %v834
    %v845 = vmul.f32 %v809, %v834
    %v846 = vmul.f32 %v810, %v834
    %v847 = vmul.f32 %v811, %v834
    %v848 = vmul.f32 %v812, %v834
    %v849 = vmul.f32 %v813, %v834
    %v850 = vmul.f32 %v814, %v834
    %v851 = vmul.f32 %v815, %v834
    %v852 = vmul.f32 %v816, %v834
    %v853 = vmul.f32 %v817, %v834
    %v854 = vmul.f32 %v818, %v834
    %v855 = vmul.f32 %v819, %v834
    %v856 = vmul.f32 %v820, %v834
    %v857 = vmul.f32 %v821, %v834
    %v858 = vmul.f32 %v822, %v834
    %v859 = vmul.f32 %v823, %v834
    %v860 = vmul.f32 %v824, %v834
    %v861 = vmul.f32 %v825, %v834
    %v862 = vmul.f32 %v826, %v834
    %v863 = vmul.f32 %v827, %v834
    %v864 = vmul.f32 %v828, %v834
    %v865 = vmul.f32 %v829, %v834
    %v866 = vmul.f32 %v830, %v834
    %v867 = vlaneseq
    %v868 = vshrl.u32 %v867, 7
    %v869 = vsub.s32 2, %v868
    %v870 = vrot.slane %v120, %v869
    %v871 = vadd.f32 %v835, %v870
    %v872 = vadd.f32 %v836, %v870
    %v873 = vadd.f32 %v837, %v870
    %v874 = vadd.f32 %v838, %v870
    %v875 = vadd.f32 %v839, %v870
    %v876 = vadd.f32 %v840, %v870
    %v877 = vadd.f32 %v841, %v870
    %v878 = vadd.f32 %v842, %v870
    %v879 = vadd.f32 %v843, %v870
    %v880 = vadd.f32 %v844, %v870
    %v881 = vadd.f32 %v845, %v870
    %v882 = vadd.f32 %v846, %v870
    %v883 = vadd.f32 %v847, %v870
    %v884 = vadd.f32 %v848, %v870
    %v885 = vadd.f32 %v849, %v870
    %v886 = vadd.f32 %v850, %v870
    %v887 = vadd.f32 %v851, %v870
    %v888 = vadd.f32 %v852, %v870
    %v889 = vadd.f32 %v853, %v870
    %v890 = vadd.f32 %v854, %v870
    %v891 = vadd.f32 %v855, %v870
    %v892 = vadd.f32 %v856, %v870
    %v893 = vadd.f32 %v857, %v870
    %v894 = vadd.f32 %v858, %v870
    %v895 = vadd.f32 %v859, %v870
    %v896 = vadd.f32 %v860, %v870
    %v897 = vadd.f32 %v861, %v870
    %v898 = vadd.f32 %v862, %v870
    %v899 = vadd.f32 %v863, %v870
    %v900 = vadd.f32 %v864, %v870
    %v901 = vadd.f32 %v865, %v870
    %v902 = vadd.f32 %v866, %v870
    %v903 = vmax.f32 %v871, 0.0
    %v904 = vmax.f32 %v872, 0.0
    %v905 = vmax.f32 %v873, 0.0
    %v906 = vmax.f32 %v874, 0.0
    %v907 = vmax.f32 %v875, 0.0
    %v908 = vmax.f32 %v876, 0.0
    %v909 = vmax.f32 %v877, 0.0
    %v910 = vmax.f32 %v878, 0.0
    %v911 = vmax.f32 %v879, 0.0
    %v912 = vmax.f32 %v880, 0.0
    %v913 = vmax.f32 %v881, 0.0
    %v914 = vmax.f32 %v882, 0.0
    %v915 = vmax.f32 %v883, 0.0
    %v916 = vmax.f32 %v884, 0.0
    %v917 = vmax.f32 %v885, 0.0
    %v918 = vmax.f32 %v886, 0.0
    %v919 = vmax.f32 %v887, 0.0
    %v920 = vmax.f32 %v888, 0.0
    %v921 = vmax.f32 %v889, 0.0
    %v922 = vmax.f32 %v890, 0.0
    %v923 = vmax.f32 %v891, 0.0
    %v924 = vmax.f32 %v892, 0.0
    %v925 = vmax.f32 %v893, 0.0
    %v926 = vmax.f32 %v894, 0.0
    %v927 = vmax.f32 %v895, 0.0
    %v928 = vmax.f32 %v896, 0.0
    %v929 = vmax.f32 %v897, 0.0
    %v930 = vmax.f32 %v898, 0.0
    %v931 = vmax.f32 %v899, 0.0
    %v932 = vmax.f32 %v900, 0.0
    %v933 = vmax.f32 %v901, 0.0
    %v934 = vmax.f32 %v902, 0.0
    %v935 = vlaneseq
    %v936 = vshrl.u32 %v935, 7
    %v937 = vsub.s32 3, %v936
    %v938 = vrot.slane %v120, %v937
    %939 = vmatprep.subr.mxu0 0.0
    %940 = vmatpush1.msra.mxu0 %v104
    %941 = vmatprep.subr.mxu0 0.0
    %942 = vmatpush1.msra.mxu0 %v105
    %943 = vmatprep.subr.mxu0 0.0
    %944 = vmatpush1.msra.mxu0 %v106
    %945 = vmatprep.subr.mxu0 0.0
    %946 = vmatpush1.msra.mxu0 %v107
    %947 = vmatprep.subr.mxu0 0.0
    %948 = vmatpush1.msra.mxu0 %v108
    %949 = vmatprep.subr.mxu0 0.0
    %950 = vmatpush1.msra.mxu0 %v109
    %951 = vmatprep.subr.mxu0 0.0
    %952 = vmatpush1.msra.mxu0 %v110
    %953 = vmatprep.subr.mxu0 0.0
    %954 = vmatpush1.msra.mxu0 %v111
    %955 = vmatprep.subr.mxu0 0.0
    %956 = vmatpush1.msra.mxu0 %v112
    %957 = vmatprep.subr.mxu0 0.0
    %958 = vmatpush1.msra.mxu0 %v113
    %959 = vmatprep.subr.mxu0 0.0
    %960 = vmatpush1.msra.mxu0 %v114
    %961 = vmatprep.subr.mxu0 0.0
    %962 = vmatpush1.msra.mxu0 %v115
    %963 = vmatprep.subr.mxu0 0.0
    %964 = vmatpush1.msra.mxu0 %v116
    %965 = vmatprep.subr.mxu0 0.0
    %966 = vmatpush1.msra.mxu0 %v117
    %967 = vmatprep.subr.mxu0 0.0
    %968 = vmatpush1.msra.mxu0 %v118
    %969 = vmatprep.subr.mxu0 0.0
    %970 = vmatpush1.msra.mxu0 %v119
    %971 = vmatprep.subr.mxu0 0.0
    %972 = vmatpush1.msra.mxu0 0.0
    %973 = vmatprep.subr.mxu0 0.0
    %974 = vmatpush1.msra.mxu0 0.0
    %975 = vmatprep.subr.mxu0 0.0
    %976 = vmatpush1.msra.mxu0 0.0
    %977 = vmatprep.subr.mxu0 0.0
    %978 = vmatpush1.msra.mxu0 0.0
    %979 = vmatprep.subr.mxu0 0.0
    %980 = vmatpush1.msra.mxu0 0.0
    %981 = vmatprep.subr.mxu0 0.0
    %982 = vmatpush1.msra.mxu0 0.0
    %983 = vmatprep.subr.mxu0 0.0
    %984 = vmatpush1.msra.mxu0 0.0
    %985 = vmatprep.subr.mxu0 0.0
    %986 = vmatpush1.msra.mxu0 0.0
    %987 = vmatprep.subr.mxu0 0.0
    %988 = vmatpush1.msra.mxu0 0.0
    %989 = vmatprep.subr.mxu0 0.0
    %990 = vmatpush1.msra.mxu0 0.0
    %991 = vmatprep.subr.mxu0 0.0
    %992 = vmatpush1.msra.mxu0 0.0
    %993 = vmatprep.subr.mxu0 0.0
    %994 = vmatpush1.msra.mxu0 0.0
    %995 = vmatprep.subr.mxu0 0.0
    %996 = vmatpush1.msra.mxu0 0.0
    %997 = vmatprep.subr.mxu0 0.0
    %998 = vmatpush1.msra.mxu0 0.0
    %999 = vmatprep.subr.mxu0 0.0
    %1000 = vmatpush1.msra.mxu0 0.0
    %1001 = vmatprep.subr.mxu0 0.0
    %1002 = vmatpush1.msra.mxu0 0.0
    %1003 = vmatprep.mubr.f32.mxu0 0.0
    %1004 = vmatmul.mubr.f32.gmra.mrb[0].mxu0 %v903
    %v1005 = vpop.f32.mrb[0].mxu0
    %v1006 = vadd.f32 %v938, %v1005
    %v1007 = vpop.f32.mrb[0].mxu0
    %1008 = vmatprep.mubr.f32.mxu0 0.0
    %1009 = vmatmul.mubr.f32.gmra.mrb[0].mxu0 %v904
    %v1010 = vpop.f32.mrb[0].mxu0
    %v1011 = vadd.f32 %v938, %v1010
    %v1012 = vpop.f32.mrb[0].mxu0
    %1013 = vmatprep.mubr.f32.mxu0 0.0
    %1014 = vmatmul.mubr.f32.gmra.mrb[0].mxu0 %v905
    %v1015 = vpop.f32.mrb[0].mxu0
    %v1016 = vadd.f32 %v938, %v1015
    %v1017 = vpop.f32.mrb[0].mxu0
    %1018 = vmatprep.mubr.f32.mxu0 0.0
    %1019 = vmatmul.mubr.f32.gmra.mrb[0].mxu0 %v906
    %v1020 = vpop.f32.mrb[0].mxu0
    %v1021 = vadd.f32 %v938, %v1020
    %v1022 = vpop.f32.mrb[0].mxu0
    %1023 = vmatprep.mubr.f32.mxu0 0.0
    %1024 = vmatmul.mubr.f32.gmra.mrb[0].mxu0 %v907
    %v1025 = vpop.f32.mrb[0].mxu0
    %v1026 = vadd.f32 %v938, %v1025
    %v1027 = vpop.f32.mrb[0].mxu0
    %1028 = vmatprep.mubr.f32.mxu0 0.0
    %1029 = vmatmul.mubr.f32.gmra.mrb[0].mxu0 %v908
    %v1030 = vpop.f32.mrb[0].mxu0
    %v1031 = vadd.f32 %v938, %v1030
    %v1032 = vpop.f32.mrb[0].mxu0
    %1033 = vmatprep.mubr.f32.mxu0 0.0
    %1034 = vmatmul.mubr.f32.gmra.mrb[0].mxu0 %v909
    %v1035 = vpop.f32.mrb[0].mxu0
    %v1036 = vadd.f32 %v938, %v1035
    %v1037 = vpop.f32.mrb[0].mxu0
    %1038 = vmatprep.mubr.f32.mxu0 0.0
    %1039 = vmatmul.mubr.f32.gmra.mrb[0].mxu0 %v910
    %v1040 = vpop.f32.mrb[0].mxu0
    %v1041 = vadd.f32 %v938, %v1040
    %v1042 = vpop.f32.mrb[0].mxu0
    %1043 = vmatprep.mubr.f32.mxu0 0.0
    %1044 = vmatmul.mubr.f32.gmra.mrb[0].mxu0 %v911
    %v1045 = vpop.f32.mrb[0].mxu0
    %v1046 = vadd.f32 %v938, %v1045
    %v1047 = vpop.f32.mrb[0].mxu0
    %1048 = vmatprep.mubr.f32.mxu0 0.0
    %1049 = vmatmul.mubr.f32.gmra.mrb[0].mxu0 %v912
    %v1050 = vpop.f32.mrb[0].mxu0
    %v1051 = vadd.f32 %v938, %v1050
    %v1052 = vpop.f32.mrb[0].mxu0
    %1053 = vmatprep.mubr.f32.mxu0 0.0
    %1054 = vmatmul.mubr.f32.gmra.mrb[0].mxu0 %v913
    %v1055 = vpop.f32.mrb[0].mxu0
    %v1056 = vadd.f32 %v938, %v1055
    %v1057 = vpop.f32.mrb[0].mxu0
    %1058 = vmatprep.mubr.f32.mxu0 0.0
    %1059 = vmatmul.mubr.f32.gmra.mrb[0].mxu0 %v914
    %v1060 = vpop.f32.mrb[0].mxu0
    %v1061 = vadd.f32 %v938, %v1060
    %v1062 = vpop.f32.mrb[0].mxu0
    %1063 = vmatprep.mubr.f32.mxu0 0.0
    %1064 = vmatmul.mubr.f32.gmra.mrb[0].mxu0 %v915
    %v1065 = vpop.f32.mrb[0].mxu0
    %v1066 = vadd.f32 %v938, %v1065
    %v1067 = vpop.f32.mrb[0].mxu0
    %1068 = vmatprep.mubr.f32.mxu0 0.0
    %1069 = vmatmul.mubr.f32.gmra.mrb[0].mxu0 %v916
    %v1070 = vpop.f32.mrb[0].mxu0
    %v1071 = vadd.f32 %v938, %v1070
    %v1072 = vpop.f32.mrb[0].mxu0
    %1073 = vmatprep.mubr.f32.mxu0 0.0
    %1074 = vmatmul.mubr.f32.gmra.mrb[0].mxu0 %v917
    %v1075 = vpop.f32.mrb[0].mxu0
    %v1076 = vadd.f32 %v938, %v1075
    %v1077 = vpop.f32.mrb[0].mxu0
    %1078 = vmatprep.mubr.f32.mxu0 0.0
    %1079 = vmatmul.mubr.f32.gmra.mrb[0].mxu0 %v918
    %v1080 = vpop.f32.mrb[0].mxu0
    %v1081 = vadd.f32 %v938, %v1080
    %v1082 = vpop.f32.mrb[0].mxu0
    %1083 = vmatprep.mubr.f32.mxu0 0.0
    %1084 = vmatmul.mubr.f32.gmra.mrb[0].mxu0 %v919
    %v1085 = vpop.f32.mrb[0].mxu0
    %v1086 = vadd.f32 %v938, %v1085
    %v1087 = vpop.f32.mrb[0].mxu0
    %1088 = vmatprep.mubr.f32.mxu0 0.0
    %1089 = vmatmul.mubr.f32.gmra.mrb[0].mxu0 %v920
    %v1090 = vpop.f32.mrb[0].mxu0
    %v1091 = vadd.f32 %v938, %v1090
    %v1092 = vpop.f32.mrb[0].mxu0
    %1093 = vmatprep.mubr.f32.mxu0 0.0
    %1094 = vmatmul.mubr.f32.gmra.mrb[0].mxu0 %v921
    %v1095 = vpop.f32.mrb[0].mxu0
    %v1096 = vadd.f32 %v938, %v1095
    %v1097 = vpop.f32.mrb[0].mxu0
    %1098 = vmatprep.mubr.f32.mxu0 0.0
    %1099 = vmatmul.mubr.f32.gmra.mrb[0].mxu0 %v922
    %v1100 = vpop.f32.mrb[0].mxu0
    %v1101 = vadd.f32 %v938, %v1100
    %v1102 = vpop.f32.mrb[0].mxu0
    %1103 = vmatprep.mubr.f32.mxu0 0.0
    %1104 = vmatmul.mubr.f32.gmra.mrb[0].mxu0 %v923
    %v1105 = vpop.f32.mrb[0].mxu0
    %v1106 = vadd.f32 %v938, %v1105
    %v1107 = vpop.f32.mrb[0].mxu0
    %1108 = vmatprep.mubr.f32.mxu0 0.0
    %1109 = vmatmul.mubr.f32.gmra.mrb[0].mxu0 %v924
    %v1110 = vpop.f32.mrb[0].mxu0
    %v1111 = vadd.f32 %v938, %v1110
    %v1112 = vpop.f32.mrb[0].mxu0
    %1113 = vmatprep.mubr.f32.mxu0 0.0
    %1114 = vmatmul.mubr.f32.gmra.mrb[0].mxu0 %v925
    %v1115 = vpop.f32.mrb[0].mxu0
    %v1116 = vadd.f32 %v938, %v1115
    %v1117 = vpop.f32.mrb[0].mxu0
    %1118 = vmatprep.mubr.f32.mxu0 0.0
    %1119 = vmatmul.mubr.f32.gmra.mrb[0].mxu0 %v926
    %v1120 = vpop.f32.mrb[0].mxu0
    %v1121 = vadd.f32 %v938, %v1120
    %v1122 = vpop.f32.mrb[0].mxu0
    %1123 = vmatprep.mubr.f32.mxu0 0.0
    %1124 = vmatmul.mubr.f32.gmra.mrb[0].mxu0 %v927
    %v1125 = vpop.f32.mrb[0].mxu0
    %v1126 = vadd.f32 %v938, %v1125
    %v1127 = vpop.f32.mrb[0].mxu0
    %1128 = vmatprep.mubr.f32.mxu0 0.0
    %1129 = vmatmul.mubr.f32.gmra.mrb[0].mxu0 %v928
    %v1130 = vpop.f32.mrb[0].mxu0
    %v1131 = vadd.f32 %v938, %v1130
    %v1132 = vpop.f32.mrb[0].mxu0
    %1133 = vmatprep.mubr.f32.mxu0 0.0
    %1134 = vmatmul.mubr.f32.gmra.mrb[0].mxu0 %v929
    %v1135 = vpop.f32.mrb[0].mxu0
    %v1136 = vadd.f32 %v938, %v1135
    %v1137 = vpop.f32.mrb[0].mxu0
    %1138 = vmatprep.mubr.f32.mxu0 0.0
    %1139 = vmatmul.mubr.f32.gmra.mrb[0].mxu0 %v930
    %v1140 = vpop.f32.mrb[0].mxu0
    %v1141 = vadd.f32 %v938, %v1140
    %v1142 = vpop.f32.mrb[0].mxu0
    %1143 = vmatprep.mubr.f32.mxu0 0.0
    %1144 = vmatmul.mubr.f32.gmra.mrb[0].mxu0 %v931
    %v1145 = vpop.f32.mrb[0].mxu0
    %v1146 = vadd.f32 %v938, %v1145
    %v1147 = vpop.f32.mrb[0].mxu0
    %1148 = vmatprep.mubr.f32.mxu0 0.0
    %1149 = vmatmul.mubr.f32.gmra.mrb[0].mxu0 %v932
    %v1150 = vpop.f32.mrb[0].mxu0
    %v1151 = vadd.f32 %v938, %v1150
    %v1152 = vpop.f32.mrb[0].mxu0
    %1153 = vmatprep.mubr.f32.mxu0 0.0
    %1154 = vmatmul.mubr.f32.gmra.mrb[0].mxu0 %v933
    %v1155 = vpop.f32.mrb[0].mxu0
    %v1156 = vadd.f32 %v938, %v1155
    %v1157 = vpop.f32.mrb[0].mxu0
    %1158 = vmatprep.mubr.f32.mxu0 0.0
    %1159 = vmatmul.mubr.f32.gmra.mrb[0].mxu0 %v934
    %v1160 = vpop.f32.mrb[0].mxu0
    %v1161 = vadd.f32 %v938, %v1160
    %v1162 = vpop.f32.mrb[0].mxu0
    %1163 = vdwg.mxu0
    %1164 = vadd.xlane.f32.xlu0 %v1006
    %v1165 = vpop.xlane.xlu0 %1164
    %1166 = vadd.xlane.f32.xlu0 %v1011
    %v1167 = vpop.xlane.xlu0 %1166
    %1168 = vadd.xlane.f32.xlu0 %v1016
    %v1169 = vpop.xlane.xlu0 %1168
    %1170 = vadd.xlane.f32.xlu0 %v1021
    %v1171 = vpop.xlane.xlu0 %1170
    %1172 = vadd.xlane.f32.xlu0 %v1026
    %v1173 = vpop.xlane.xlu0 %1172
    %1174 = vadd.xlane.f32.xlu0 %v1031
    %v1175 = vpop.xlane.xlu0 %1174
    %1176 = vadd.xlane.f32.xlu0 %v1036
    %v1177 = vpop.xlane.xlu0 %1176
    %1178 = vadd.xlane.f32.xlu0 %v1041
    %v1179 = vpop.xlane.xlu0 %1178
    %1180 = vadd.xlane.f32.xlu0 %v1046
    %v1181 = vpop.xlane.xlu0 %1180
    %1182 = vadd.xlane.f32.xlu0 %v1051
    %v1183 = vpop.xlane.xlu0 %1182
    %1184 = vadd.xlane.f32.xlu0 %v1056
    %v1185 = vpop.xlane.xlu0 %1184
    %1186 = vadd.xlane.f32.xlu0 %v1061
    %v1187 = vpop.xlane.xlu0 %1186
    %1188 = vadd.xlane.f32.xlu0 %v1066
    %v1189 = vpop.xlane.xlu0 %1188
    %1190 = vadd.xlane.f32.xlu0 %v1071
    %v1191 = vpop.xlane.xlu0 %1190
    %1192 = vadd.xlane.f32.xlu0 %v1076
    %v1193 = vpop.xlane.xlu0 %1192
    %1194 = vadd.xlane.f32.xlu0 %v1081
    %v1195 = vpop.xlane.xlu0 %1194
    %1196 = vadd.xlane.f32.xlu0 %v1086
    %v1197 = vpop.xlane.xlu0 %1196
    %1198 = vadd.xlane.f32.xlu0 %v1091
    %v1199 = vpop.xlane.xlu0 %1198
    %1200 = vadd.xlane.f32.xlu0 %v1096
    %v1201 = vpop.xlane.xlu0 %1200
    %1202 = vadd.xlane.f32.xlu0 %v1101
    %v1203 = vpop.xlane.xlu0 %1202
    %1204 = vadd.xlane.f32.xlu0 %v1106
    %v1205 = vpop.xlane.xlu0 %1204
    %1206 = vadd.xlane.f32.xlu0 %v1111
    %v1207 = vpop.xlane.xlu0 %1206
    %1208 = vadd.xlane.f32.xlu0 %v1116
    %v1209 = vpop.xlane.xlu0 %1208
    %1210 = vadd.xlane.f32.xlu0 %v1121
    %v1211 = vpop.xlane.xlu0 %1210
    %1212 = vadd.xlane.f32.xlu0 %v1126
    %v1213 = vpop.xlane.xlu0 %1212
    %1214 = vadd.xlane.f32.xlu0 %v1131
    %v1215 = vpop.xlane.xlu0 %1214
    %1216 = vadd.xlane.f32.xlu0 %v1136
    %v1217 = vpop.xlane.xlu0 %1216
    %1218 = vadd.xlane.f32.xlu0 %v1141
    %v1219 = vpop.xlane.xlu0 %1218
    %1220 = vadd.xlane.f32.xlu0 %v1146
    %v1221 = vpop.xlane.xlu0 %1220
    %1222 = vadd.xlane.f32.xlu0 %v1151
    %v1223 = vpop.xlane.xlu0 %1222
    %1224 = vadd.xlane.f32.xlu0 %v1156
    %v1225 = vpop.xlane.xlu0 %1224
    %1226 = vadd.xlane.f32.xlu0 %v1161
    %v1227 = vpop.xlane.xlu0 %1226
    %v1228 = vmul.f32 %v1165, 0.03125
    %v1229 = vmul.f32 %v1167, 0.03125
    %v1230 = vmul.f32 %v1169, 0.03125
    %v1231 = vmul.f32 %v1171, 0.03125
    %v1232 = vmul.f32 %v1173, 0.03125
    %v1233 = vmul.f32 %v1175, 0.03125
    %v1234 = vmul.f32 %v1177, 0.03125
    %v1235 = vmul.f32 %v1179, 0.03125
    %v1236 = vmul.f32 %v1181, 0.03125
    %v1237 = vmul.f32 %v1183, 0.03125
    %v1238 = vmul.f32 %v1185, 0.03125
    %v1239 = vmul.f32 %v1187, 0.03125
    %v1240 = vmul.f32 %v1189, 0.03125
    %v1241 = vmul.f32 %v1191, 0.03125
    %v1242 = vmul.f32 %v1193, 0.03125
    %v1243 = vmul.f32 %v1195, 0.03125
    %v1244 = vmul.f32 %v1197, 0.03125
    %v1245 = vmul.f32 %v1199, 0.03125
    %v1246 = vmul.f32 %v1201, 0.03125
    %v1247 = vmul.f32 %v1203, 0.03125
    %v1248 = vmul.f32 %v1205, 0.03125
    %v1249 = vmul.f32 %v1207, 0.03125
    %v1250 = vmul.f32 %v1209, 0.03125
    %v1251 = vmul.f32 %v1211, 0.03125
    %v1252 = vmul.f32 %v1213, 0.03125
    %v1253 = vmul.f32 %v1215, 0.03125
    %v1254 = vmul.f32 %v1217, 0.03125
    %v1255 = vmul.f32 %v1219, 0.03125
    %v1256 = vmul.f32 %v1221, 0.03125
    %v1257 = vmul.f32 %v1223, 0.03125
    %v1258 = vmul.f32 %v1225, 0.03125
    %v1259 = vmul.f32 %v1227, 0.03125
    %v1260 = vmul.f32 %v1006, %v1006
    %v1261 = vmul.f32 %v1011, %v1011
    %v1262 = vmul.f32 %v1016, %v1016
    %v1263 = vmul.f32 %v1021, %v1021
    %v1264 = vmul.f32 %v1026, %v1026
    %v1265 = vmul.f32 %v1031, %v1031
    %v1266 = vmul.f32 %v1036, %v1036
    %v1267 = vmul.f32 %v1041, %v1041
    %v1268 = vmul.f32 %v1046, %v1046
    %v1269 = vmul.f32 %v1051, %v1051
    %v1270 = vmul.f32 %v1056, %v1056
    %v1271 = vmul.f32 %v1061, %v1061
    %v1272 = vmul.f32 %v1066, %v1066
    %v1273 = vmul.f32 %v1071, %v1071
    %v1274 = vmul.f32 %v1076, %v1076
    %v1275 = vmul.f32 %v1081, %v1081
    %v1276 = vmul.f32 %v1086, %v1086
    %v1277 = vmul.f32 %v1091, %v1091
    %v1278 = vmul.f32 %v1096, %v1096
    %v1279 = vmul.f32 %v1101, %v1101
    %v1280 = vmul.f32 %v1106, %v1106
    %v1281 = vmul.f32 %v1111, %v1111
    %v1282 = vmul.f32 %v1116, %v1116
    %v1283 = vmul.f32 %v1121, %v1121
    %v1284 = vmul.f32 %v1126, %v1126
    %v1285 = vmul.f32 %v1131, %v1131
    %v1286 = vmul.f32 %v1136, %v1136
    %v1287 = vmul.f32 %v1141, %v1141
    %v1288 = vmul.f32 %v1146, %v1146
    %v1289 = vmul.f32 %v1151, %v1151
    %v1290 = vmul.f32 %v1156, %v1156
    %v1291 = vmul.f32 %v1161, %v1161
    %1292 = vadd.xlane.f32.xlu0 %v1260
    %v1293 = vpop.xlane.xlu0 %1292
    %1294 = vadd.xlane.f32.xlu0 %v1261
    %v1295 = vpop.xlane.xlu0 %1294
    %1296 = vadd.xlane.f32.xlu0 %v1262
    %v1297 = vpop.xlane.xlu0 %1296
    %1298 = vadd.xlane.f32.xlu0 %v1263
    %v1299 = vpop.xlane.xlu0 %1298
    %1300 = vadd.xlane.f32.xlu0 %v1264
    %v1301 = vpop.xlane.xlu0 %1300
    %1302 = vadd.xlane.f32.xlu0 %v1265
    %v1303 = vpop.xlane.xlu0 %1302
    %1304 = vadd.xlane.f32.xlu0 %v1266
    %v1305 = vpop.xlane.xlu0 %1304
    %1306 = vadd.xlane.f32.xlu0 %v1267
    %v1307 = vpop.xlane.xlu0 %1306
    %1308 = vadd.xlane.f32.xlu0 %v1268
    %v1309 = vpop.xlane.xlu0 %1308
    %1310 = vadd.xlane.f32.xlu0 %v1269
    %v1311 = vpop.xlane.xlu0 %1310
    %1312 = vadd.xlane.f32.xlu0 %v1270
    %v1313 = vpop.xlane.xlu0 %1312
    %1314 = vadd.xlane.f32.xlu0 %v1271
    %v1315 = vpop.xlane.xlu0 %1314
    %1316 = vadd.xlane.f32.xlu0 %v1272
    %v1317 = vpop.xlane.xlu0 %1316
    %1318 = vadd.xlane.f32.xlu0 %v1273
    %v1319 = vpop.xlane.xlu0 %1318
    %1320 = vadd.xlane.f32.xlu0 %v1274
    %v1321 = vpop.xlane.xlu0 %1320
    %1322 = vadd.xlane.f32.xlu0 %v1275
    %v1323 = vpop.xlane.xlu0 %1322
    %1324 = vadd.xlane.f32.xlu0 %v1276
    %v1325 = vpop.xlane.xlu0 %1324
    %1326 = vadd.xlane.f32.xlu0 %v1277
    %v1327 = vpop.xlane.xlu0 %1326
    %1328 = vadd.xlane.f32.xlu0 %v1278
    %v1329 = vpop.xlane.xlu0 %1328
    %1330 = vadd.xlane.f32.xlu0 %v1279
    %v1331 = vpop.xlane.xlu0 %1330
    %1332 = vadd.xlane.f32.xlu0 %v1280
    %v1333 = vpop.xlane.xlu0 %1332
    %1334 = vadd.xlane.f32.xlu0 %v1281
    %v1335 = vpop.xlane.xlu0 %1334
    %1336 = vadd.xlane.f32.xlu0 %v1282
    %v1337 = vpop.xlane.xlu0 %1336
    %1338 = vadd.xlane.f32.xlu0 %v1283
    %v1339 = vpop.xlane.xlu0 %1338
    %1340 = vadd.xlane.f32.xlu0 %v1284
    %v1341 = vpop.xlane.xlu0 %1340
    %1342 = vadd.xlane.f32.xlu0 %v1285
    %v1343 = vpop.xlane.xlu0 %1342
    %1344 = vadd.xlane.f32.xlu0 %v1286
    %v1345 = vpop.xlane.xlu0 %1344
    %1346 = vadd.xlane.f32.xlu0 %v1287
    %v1347 = vpop.xlane.xlu0 %1346
    %1348 = vadd.xlane.f32.xlu0 %v1288
    %v1349 = vpop.xlane.xlu0 %1348
    %1350 = vadd.xlane.f32.xlu0 %v1289
    %v1351 = vpop.xlane.xlu0 %1350
    %1352 = vadd.xlane.f32.xlu0 %v1290
    %v1353 = vpop.xlane.xlu0 %1352
    %1354 = vadd.xlane.f32.xlu0 %v1291
    %v1355 = vpop.xlane.xlu0 %1354
    %v1356 = vmul.f32 %v1293, 0.03125
    %v1357 = vmul.f32 %v1295, 0.03125
    %v1358 = vmul.f32 %v1297, 0.03125
    %v1359 = vmul.f32 %v1299, 0.03125
    %v1360 = vmul.f32 %v1301, 0.03125
    %v1361 = vmul.f32 %v1303, 0.03125
    %v1362 = vmul.f32 %v1305, 0.03125
    %v1363 = vmul.f32 %v1307, 0.03125
    %v1364 = vmul.f32 %v1309, 0.03125
    %v1365 = vmul.f32 %v1311, 0.03125
    %v1366 = vmul.f32 %v1313, 0.03125
    %v1367 = vmul.f32 %v1315, 0.03125
    %v1368 = vmul.f32 %v1317, 0.03125
    %v1369 = vmul.f32 %v1319, 0.03125
    %v1370 = vmul.f32 %v1321, 0.03125
    %v1371 = vmul.f32 %v1323, 0.03125
    %v1372 = vmul.f32 %v1325, 0.03125
    %v1373 = vmul.f32 %v1327, 0.03125
    %v1374 = vmul.f32 %v1329, 0.03125
    %v1375 = vmul.f32 %v1331, 0.03125
    %v1376 = vmul.f32 %v1333, 0.03125
    %v1377 = vmul.f32 %v1335, 0.03125
    %v1378 = vmul.f32 %v1337, 0.03125
    %v1379 = vmul.f32 %v1339, 0.03125
    %v1380 = vmul.f32 %v1341, 0.03125
    %v1381 = vmul.f32 %v1343, 0.03125
    %v1382 = vmul.f32 %v1345, 0.03125
    %v1383 = vmul.f32 %v1347, 0.03125
    %v1384 = vmul.f32 %v1349, 0.03125
    %v1385 = vmul.f32 %v1351, 0.03125
    %v1386 = vmul.f32 %v1353, 0.03125
    %v1387 = vmul.f32 %v1355, 0.03125
    %v1388 = vmul.f32 %v1228, %v1228
    %v1389 = vmul.f32 %v1229, %v1229
    %v1390 = vmul.f32 %v1230, %v1230
    %v1391 = vmul.f32 %v1231, %v1231
    %v1392 = vmul.f32 %v1232, %v1232
    %v1393 = vmul.f32 %v1233, %v1233
    %v1394 = vmul.f32 %v1234, %v1234
    %v1395 = vmul.f32 %v1235, %v1235
    %v1396 = vmul.f32 %v1236, %v1236
    %v1397 = vmul.f32 %v1237, %v1237
    %v1398 = vmul.f32 %v1238, %v1238
    %v1399 = vmul.f32 %v1239, %v1239
    %v1400 = vmul.f32 %v1240, %v1240
    %v1401 = vmul.f32 %v1241, %v1241
    %v1402 = vmul.f32 %v1242, %v1242
    %v1403 = vmul.f32 %v1243, %v1243
    %v1404 = vmul.f32 %v1244, %v1244
    %v1405 = vmul.f32 %v1245, %v1245
    %v1406 = vmul.f32 %v1246, %v1246
    %v1407 = vmul.f32 %v1247, %v1247
    %v1408 = vmul.f32 %v1248, %v1248
    %v1409 = vmul.f32 %v1249, %v1249
    %v1410 = vmul.f32 %v1250, %v1250
    %v1411 = vmul.f32 %v1251, %v1251
    %v1412 = vmul.f32 %v1252, %v1252
    %v1413 = vmul.f32 %v1253, %v1253
    %v1414 = vmul.f32 %v1254, %v1254
    %v1415 = vmul.f32 %v1255, %v1255
    %v1416 = vmul.f32 %v1256, %v1256
    %v1417 = vmul.f32 %v1257, %v1257
    %v1418 = vmul.f32 %v1258, %v1258
    %v1419 = vmul.f32 %v1259, %v1259
    %v1420 = vsub.f32 %v1356, %v1388
    %v1421 = vsub.f32 %v1357, %v1389
    %v1422 = vsub.f32 %v1358, %v1390
    %v1423 = vsub.f32 %v1359, %v1391
    %v1424 = vsub.f32 %v1360, %v1392
    %v1425 = vsub.f32 %v1361, %v1393
    %v1426 = vsub.f32 %v1362, %v1394
    %v1427 = vsub.f32 %v1363, %v1395
    %v1428 = vsub.f32 %v1364, %v1396
    %v1429 = vsub.f32 %v1365, %v1397
    %v1430 = vsub.f32 %v1366, %v1398
    %v1431 = vsub.f32 %v1367, %v1399
    %v1432 = vsub.f32 %v1368, %v1400
    %v1433 = vsub.f32 %v1369, %v1401
    %v1434 = vsub.f32 %v1370, %v1402
    %v1435 = vsub.f32 %v1371, %v1403
    %v1436 = vsub.f32 %v1372, %v1404
    %v1437 = vsub.f32 %v1373, %v1405
    %v1438 = vsub.f32 %v1374, %v1406
    %v1439 = vsub.f32 %v1375, %v1407
    %v1440 = vsub.f32 %v1376, %v1408
    %v1441 = vsub.f32 %v1377, %v1409
    %v1442 = vsub.f32 %v1378, %v1410
    %v1443 = vsub.f32 %v1379, %v1411
    %v1444 = vsub.f32 %v1380, %v1412
    %v1445 = vsub.f32 %v1381, %v1413
    %v1446 = vsub.f32 %v1382, %v1414
    %v1447 = vsub.f32 %v1383, %v1415
    %v1448 = vsub.f32 %v1384, %v1416
    %v1449 = vsub.f32 %v1385, %v1417
    %v1450 = vsub.f32 %v1386, %v1418
    %v1451 = vsub.f32 %v1387, %v1419
    %v1452 = vsub.f32 %v1006, %v1228
    %v1453 = vsub.f32 %v1011, %v1229
    %v1454 = vsub.f32 %v1016, %v1230
    %v1455 = vsub.f32 %v1021, %v1231
    %v1456 = vsub.f32 %v1026, %v1232
    %v1457 = vsub.f32 %v1031, %v1233
    %v1458 = vsub.f32 %v1036, %v1234
    %v1459 = vsub.f32 %v1041, %v1235
    %v1460 = vsub.f32 %v1046, %v1236
    %v1461 = vsub.f32 %v1051, %v1237
    %v1462 = vsub.f32 %v1056, %v1238
    %v1463 = vsub.f32 %v1061, %v1239
    %v1464 = vsub.f32 %v1066, %v1240
    %v1465 = vsub.f32 %v1071, %v1241
    %v1466 = vsub.f32 %v1076, %v1242
    %v1467 = vsub.f32 %v1081, %v1243
    %v1468 = vsub.f32 %v1086, %v1244
    %v1469 = vsub.f32 %v1091, %v1245
    %v1470 = vsub.f32 %v1096, %v1246
    %v1471 = vsub.f32 %v1101, %v1247
    %v1472 = vsub.f32 %v1106, %v1248
    %v1473 = vsub.f32 %v1111, %v1249
    %v1474 = vsub.f32 %v1116, %v1250
    %v1475 = vsub.f32 %v1121, %v1251
    %v1476 = vsub.f32 %v1126, %v1252
    %v1477 = vsub.f32 %v1131, %v1253
    %v1478 = vsub.f32 %v1136, %v1254
    %v1479 = vsub.f32 %v1141, %v1255
    %v1480 = vsub.f32 %v1146, %v1256
    %v1481 = vsub.f32 %v1151, %v1257
    %v1482 = vsub.f32 %v1156, %v1258
    %v1483 = vsub.f32 %v1161, %v1259
    %v1484 = vadd.f32 %v1420, 1e-05
    %v1485 = vadd.f32 %v1421, 1e-05
    %v1486 = vadd.f32 %v1422, 1e-05
    %v1487 = vadd.f32 %v1423, 1e-05
    %v1488 = vadd.f32 %v1424, 1e-05
    %v1489 = vadd.f32 %v1425, 1e-05
    %v1490 = vadd.f32 %v1426, 1e-05
    %v1491 = vadd.f32 %v1427, 1e-05
    %v1492 = vadd.f32 %v1428, 1e-05
    %v1493 = vadd.f32 %v1429, 1e-05
    %v1494 = vadd.f32 %v1430, 1e-05
    %v1495 = vadd.f32 %v1431, 1e-05
    %v1496 = vadd.f32 %v1432, 1e-05
    %v1497 = vadd.f32 %v1433, 1e-05
    %v1498 = vadd.f32 %v1434, 1e-05
    %v1499 = vadd.f32 %v1435, 1e-05
    %v1500 = vadd.f32 %v1436, 1e-05
    %v1501 = vadd.f32 %v1437, 1e-05
    %v1502 = vadd.f32 %v1438, 1e-05
    %v1503 = vadd.f32 %v1439, 1e-05
    %v1504 = vadd.f32 %v1440, 1e-05
    %v1505 = vadd.f32 %v1441, 1e-05
    %v1506 = vadd.f32 %v1442, 1e-05
    %v1507 = vadd.f32 %v1443, 1e-05
    %v1508 = vadd.f32 %v1444, 1e-05
    %v1509 = vadd.f32 %v1445, 1e-05
    %v1510 = vadd.f32 %v1446, 1e-05
    %v1511 = vadd.f32 %v1447, 1e-05
    %v1512 = vadd.f32 %v1448, 1e-05
    %v1513 = vadd.f32 %v1449, 1e-05
    %v1514 = vadd.f32 %v1450, 1e-05
    %v1515 = vadd.f32 %v1451, 1e-05
    %v1516 = vrsqrt.pop %v1484
    %v1517 = vrsqrt.pop %v1485
    %v1518 = vrsqrt.pop %v1486
    %v1519 = vrsqrt.pop %v1487
    %v1520 = vrsqrt.pop %v1488
    %v1521 = vrsqrt.pop %v1489
    %v1522 = vrsqrt.pop %v1490
    %v1523 = vrsqrt.pop %v1491
    %v1524 = vrsqrt.pop %v1492
    %v1525 = vrsqrt.pop %v1493
    %v1526 = vrsqrt.pop %v1494
    %v1527 = vrsqrt.pop %v1495
    %v1528 = vrsqrt.pop %v1496
    %v1529 = vrsqrt.pop %v1497
    %v1530 = vrsqrt.pop %v1498
    %v1531 = vrsqrt.pop %v1499
    %v1532 = vrsqrt.pop %v1500
    %v1533 = vrsqrt.pop %v1501
    %v1534 = vrsqrt.pop %v1502
    %v1535 = vrsqrt.pop %v1503
    %v1536 = vrsqrt.pop %v1504
    %v1537 = vrsqrt.pop %v1505
    %v1538 = vrsqrt.pop %v1506
    %v1539 = vrsqrt.pop %v1507
    %v1540 = vrsqrt.pop %v1508
    %v1541 = vrsqrt.pop %v1509
    %v1542 = vrsqrt.pop %v1510
    %v1543 = vrsqrt.pop %v1511
    %v1544 = vrsqrt.pop %v1512
    %v1545 = vrsqrt.pop %v1513
    %v1546 = vrsqrt.pop %v1514
    %v1547 = vrsqrt.pop %v1515
    %v1548 = vmul.f32 %v1452, %v1516
    %v1549 = vmul.f32 %v1453, %v1517
    %v1550 = vmul.f32 %v1454, %v1518
    %v1551 = vmul.f32 %v1455, %v1519
    %v1552 = vmul.f32 %v1456, %v1520
    %v1553 = vmul.f32 %v1457, %v1521
    %v1554 = vmul.f32 %v1458, %v1522
    %v1555 = vmul.f32 %v1459, %v1523
    %v1556 = vmul.f32 %v1460, %v1524
    %v1557 = vmul.f32 %v1461, %v1525
    %v1558 = vmul.f32 %v1462, %v1526
    %v1559 = vmul.f32 %v1463, %v1527
    %v1560 = vmul.f32 %v1464, %v1528
    %v1561 = vmul.f32 %v1465, %v1529
    %v1562 = vmul.f32 %v1466, %v1530
    %v1563 = vmul.f32 %v1467, %v1531
    %v1564 = vmul.f32 %v1468, %v1532
    %v1565 = vmul.f32 %v1469, %v1533
    %v1566 = vmul.f32 %v1470, %v1534
    %v1567 = vmul.f32 %v1471, %v1535
    %v1568 = vmul.f32 %v1472, %v1536
    %v1569 = vmul.f32 %v1473, %v1537
    %v1570 = vmul.f32 %v1474, %v1538
    %v1571 = vmul.f32 %v1475, %v1539
    %v1572 = vmul.f32 %v1476, %v1540
    %v1573 = vmul.f32 %v1477, %v1541
    %v1574 = vmul.f32 %v1478, %v1542
    %v1575 = vmul.f32 %v1479, %v1543
    %v1576 = vmul.f32 %v1480, %v1544
    %v1577 = vmul.f32 %v1481, %v1545
    %v1578 = vmul.f32 %v1482, %v1546
    %v1579 = vmul.f32 %v1483, %v1547
    %v1580 = vlaneseq
    %v1581 = vshrl.u32 %v1580, 7
    %v1582 = vsub.s32 4, %v1581
    %v1583 = vrot.slane %v120, %v1582
    %v1584 = vmul.f32 %v1548, %v1583
    %v1585 = vmul.f32 %v1549, %v1583
    %v1586 = vmul.f32 %v1550, %v1583
    %v1587 = vmul.f32 %v1551, %v1583
    %v1588 = vmul.f32 %v1552, %v1583
    %v1589 = vmul.f32 %v1553, %v1583
    %v1590 = vmul.f32 %v1554, %v1583
    %v1591 = vmul.f32 %v1555, %v1583
    %v1592 = vmul.f32 %v1556, %v1583
    %v1593 = vmul.f32 %v1557, %v1583
    %v1594 = vmul.f32 %v1558, %v1583
    %v1595 = vmul.f32 %v1559, %v1583
    %v1596 = vmul.f32 %v1560, %v1583
    %v1597 = vmul.f32 %v1561, %v1583
    %v1598 = vmul.f32 %v1562, %v1583
    %v1599 = vmul.f32 %v1563, %v1583
    %v1600 = vmul.f32 %v1564, %v1583
    %v1601 = vmul.f32 %v1565, %v1583
    %v1602 = vmul.f32 %v1566, %v1583
    %v1603 = vmul.f32 %v1567, %v1583
    %v1604 = vmul.f32 %v1568, %v1583
    %v1605 = vmul.f32 %v1569, %v1583
    %v1606 = vmul.f32 %v1570, %v1583
    %v1607 = vmul.f32 %v1571, %v1583
    %v1608 = vmul.f32 %v1572, %v1583
    %v1609 = vmul.f32 %v1573, %v1583
    %v1610 = vmul.f32 %v1574, %v1583
    %v1611 = vmul.f32 %v1575, %v1583
    %v1612 = vmul.f32 %v1576, %v1583
    %v1613 = vmul.f32 %v1577, %v1583
    %v1614 = vmul.f32 %v1578, %v1583
    %v1615 = vmul.f32 %v1579, %v1583
    %v1616 = vlaneseq
    %v1617 = vshrl.u32 %v1616, 7
    %v1618 = vsub.s32 5, %v1617
    %v1619 = vrot.slane %v120, %v1618
    %v1620 = vadd.f32 %v1584, %v1619
    %v1621 = vadd.f32 %v1585, %v1619
    %v1622 = vadd.f32 %v1586, %v1619
    %v1623 = vadd.f32 %v1587, %v1619
    %v1624 = vadd.f32 %v1588, %v1619
    %v1625 = vadd.f32 %v1589, %v1619
    %v1626 = vadd.f32 %v1590, %v1619
    %v1627 = vadd.f32 %v1591, %v1619
    %v1628 = vadd.f32 %v1592, %v1619
    %v1629 = vadd.f32 %v1593, %v1619
    %v1630 = vadd.f32 %v1594, %v1619
    %v1631 = vadd.f32 %v1595, %v1619
    %v1632 = vadd.f32 %v1596, %v1619
    %v1633 = vadd.f32 %v1597, %v1619
    %v1634 = vadd.f32 %v1598, %v1619
    %v1635 = vadd.f32 %v1599, %v1619
    %v1636 = vadd.f32 %v1600, %v1619
    %v1637 = vadd.f32 %v1601, %v1619
    %v1638 = vadd.f32 %v1602, %v1619
    %v1639 = vadd.f32 %v1603, %v1619
    %v1640 = vadd.f32 %v1604, %v1619
    %v1641 = vadd.f32 %v1605, %v1619
    %v1642 = vadd.f32 %v1606, %v1619
    %v1643 = vadd.f32 %v1607, %v1619
    %v1644 = vadd.f32 %v1608, %v1619
    %v1645 = vadd.f32 %v1609, %v1619
    %v1646 = vadd.f32 %v1610, %v1619
    %v1647 = vadd.f32 %v1611, %v1619
    %v1648 = vadd.f32 %v1612, %v1619
    %v1649 = vadd.f32 %v1613, %v1619
    %v1650 = vadd.f32 %v1614, %v1619
    %v1651 = vadd.f32 %v1615, %v1619
    %v1652 = vlaneseq
    %v1653 = vshrl.u32 %v1652, 7
    %v1654 = vsub.s32 6, %v1653
    %v1655 = vrot.slane %v120, %v1654
    %v1656 = vadd.f32 %v191, %v1655
    %v1657 = vadd.f32 %v197, %v1655
    %v1658 = vadd.f32 %v203, %v1655
    %v1659 = vadd.f32 %v209, %v1655
    %v1660 = vadd.f32 %v215, %v1655
    %v1661 = vadd.f32 %v221, %v1655
    %v1662 = vadd.f32 %v227, %v1655
    %v1663 = vadd.f32 %v233, %v1655
    %v1664 = vadd.f32 %v239, %v1655
    %v1665 = vadd.f32 %v245, %v1655
    %v1666 = vadd.f32 %v251, %v1655
    %v1667 = vadd.f32 %v257, %v1655
    %v1668 = vadd.f32 %v263, %v1655
    %v1669 = vadd.f32 %v269, %v1655
    %v1670 = vadd.f32 %v275, %v1655
    %v1671 = vadd.f32 %v281, %v1655
    %v1672 = vadd.f32 %v287, %v1655
    %v1673 = vadd.f32 %v293, %v1655
    %v1674 = vadd.f32 %v299, %v1655
    %v1675 = vadd.f32 %v305, %v1655
    %v1676 = vadd.f32 %v311, %v1655
    %v1677 = vadd.f32 %v317, %v1655
    %v1678 = vadd.f32 %v323, %v1655
    %v1679 = vadd.f32 %v329, %v1655
    %v1680 = vadd.f32 %v335, %v1655
    %v1681 = vadd.f32 %v341, %v1655
    %v1682 = vadd.f32 %v347, %v1655
    %v1683 = vadd.f32 %v353, %v1655
    %v1684 = vadd.f32 %v359, %v1655
    %v1685 = vadd.f32 %v365, %v1655
    %v1686 = vadd.f32 %v371, %v1655
    %v1687 = vadd.f32 %v377, %v1655
    %v1688 = vmax.f32 %v1656, 0.0
    %v1689 = vmax.f32 %v1657, 0.0
    %v1690 = vmax.f32 %v1658, 0.0
    %v1691 = vmax.f32 %v1659, 0.0
    %v1692 = vmax.f32 %v1660, 0.0
    %v1693 = vmax.f32 %v1661, 0.0
    %v1694 = vmax.f32 %v1662, 0.0
    %v1695 = vmax.f32 %v1663, 0.0
    %v1696 = vmax.f32 %v1664, 0.0
    %v1697 = vmax.f32 %v1665, 0.0
    %v1698 = vmax.f32 %v1666, 0.0
    %v1699 = vmax.f32 %v1667, 0.0
    %v1700 = vmax.f32 %v1668, 0.0
    %v1701 = vmax.f32 %v1669, 0.0
    %v1702 = vmax.f32 %v1670, 0.0
    %v1703 = vmax.f32 %v1671, 0.0
    %v1704 = vmax.f32 %v1672, 0.0
    %v1705 = vmax.f32 %v1673, 0.0
    %v1706 = vmax.f32 %v1674, 0.0
    %v1707 = vmax.f32 %v1675, 0.0
    %v1708 = vmax.f32 %v1676, 0.0
    %v1709 = vmax.f32 %v1677, 0.0
    %v1710 = vmax.f32 %v1678, 0.0
    %v1711 = vmax.f32 %v1679, 0.0
    %v1712 = vmax.f32 %v1680, 0.0
    %v1713 = vmax.f32 %v1681, 0.0
    %v1714 = vmax.f32 %v1682, 0.0
    %v1715 = vmax.f32 %v1683, 0.0
    %v1716 = vmax.f32 %v1684, 0.0
    %v1717 = vmax.f32 %v1685, 0.0
    %v1718 = vmax.f32 %v1686, 0.0
    %v1719 = vmax.f32 %v1687, 0.0
    %v1720 = vadd.f32 %v1620, %v1688
    %v1721 = vadd.f32 %v1621, %v1689
    %v1722 = vadd.f32 %v1622, %v1690
    %v1723 = vadd.f32 %v1623, %v1691
    %v1724 = vadd.f32 %v1624, %v1692
    %v1725 = vadd.f32 %v1625, %v1693
    %v1726 = vadd.f32 %v1626, %v1694
    %v1727 = vadd.f32 %v1627, %v1695
    %v1728 = vadd.f32 %v1628, %v1696
    %v1729 = vadd.f32 %v1629, %v1697
    %v1730 = vadd.f32 %v1630, %v1698
    %v1731 = vadd.f32 %v1631, %v1699
    %v1732 = vadd.f32 %v1632, %v1700
    %v1733 = vadd.f32 %v1633, %v1701
    %v1734 = vadd.f32 %v1634, %v1702
    %v1735 = vadd.f32 %v1635, %v1703
    %v1736 = vadd.f32 %v1636, %v1704
    %v1737 = vadd.f32 %v1637, %v1705
    %v1738 = vadd.f32 %v1638, %v1706
    %v1739 = vadd.f32 %v1639, %v1707
    %v1740 = vadd.f32 %v1640, %v1708
    %v1741 = vadd.f32 %v1641, %v1709
    %v1742 = vadd.f32 %v1642, %v1710
    %v1743 = vadd.f32 %v1643, %v1711
    %v1744 = vadd.f32 %v1644, %v1712
    %v1745 = vadd.f32 %v1645, %v1713
    %v1746 = vadd.f32 %v1646, %v1714
    %v1747 = vadd.f32 %v1647, %v1715
    %v1748 = vadd.f32 %v1648, %v1716
    %v1749 = vadd.f32 %v1649, %v1717
    %v1750 = vadd.f32 %v1650, %v1718
    %v1751 = vadd.f32 %v1651, %v1719
    %v1752 = vmax.f32 %v1720, 0.0
    %v1753 = vmax.f32 %v1721, 0.0
    %v1754 = vmax.f32 %v1722, 0.0
    %v1755 = vmax.f32 %v1723, 0.0
    %v1756 = vmax.f32 %v1724, 0.0
    %v1757 = vmax.f32 %v1725, 0.0
    %v1758 = vmax.f32 %v1726, 0.0
    %v1759 = vmax.f32 %v1727, 0.0
    %v1760 = vmax.f32 %v1728, 0.0
    %v1761 = vmax.f32 %v1729, 0.0
    %v1762 = vmax.f32 %v1730, 0.0
    %v1763 = vmax.f32 %v1731, 0.0
    %v1764 = vmax.f32 %v1732, 0.0
    %v1765 = vmax.f32 %v1733, 0.0
    %v1766 = vmax.f32 %v1734, 0.0
    %v1767 = vmax.f32 %v1735, 0.0
    %v1768 = vmax.f32 %v1736, 0.0
    %v1769 = vmax.f32 %v1737, 0.0
    %v1770 = vmax.f32 %v1738, 0.0
    %v1771 = vmax.f32 %v1739, 0.0
    %v1772 = vmax.f32 %v1740, 0.0
    %v1773 = vmax.f32 %v1741, 0.0
    %v1774 = vmax.f32 %v1742, 0.0
    %v1775 = vmax.f32 %v1743, 0.0
    %v1776 = vmax.f32 %v1744, 0.0
    %v1777 = vmax.f32 %v1745, 0.0
    %v1778 = vmax.f32 %v1746, 0.0
    %v1779 = vmax.f32 %v1747, 0.0
    %v1780 = vmax.f32 %v1748, 0.0
    %v1781 = vmax.f32 %v1749, 0.0
    %v1782 = vmax.f32 %v1750, 0.0
    %v1783 = vmax.f32 %v1751, 0.0
    %v1784 = vlaneseq
    %v1785 = vshrl.u32 %v1784, 7
    %v1786 = vsub.s32 7, %v1785
    %v1787 = vrot.slane %v120, %v1786
    %v1788 = vmul.f32 %v1752, %v1787
    %v1789 = vmul.f32 %v1753, %v1787
    %v1790 = vmul.f32 %v1754, %v1787
    %v1791 = vmul.f32 %v1755, %v1787
    %v1792 = vmul.f32 %v1756, %v1787
    %v1793 = vmul.f32 %v1757, %v1787
    %v1794 = vmul.f32 %v1758, %v1787
    %v1795 = vmul.f32 %v1759, %v1787
    %v1796 = vmul.f32 %v1760, %v1787
    %v1797 = vmul.f32 %v1761, %v1787
    %v1798 = vmul.f32 %v1762, %v1787
    %v1799 = vmul.f32 %v1763, %v1787
    %v1800 = vmul.f32 %v1764, %v1787
    %v1801 = vmul.f32 %v1765, %v1787
    %v1802 = vmul.f32 %v1766, %v1787
    %v1803 = vmul.f32 %v1767, %v1787
    %v1804 = vmul.f32 %v1768, %v1787
    %v1805 = vmul.f32 %v1769, %v1787
    %v1806 = vmul.f32 %v1770, %v1787
    %v1807 = vmul.f32 %v1771, %v1787
    %v1808 = vmul.f32 %v1772, %v1787
    %v1809 = vmul.f32 %v1773, %v1787
    %v1810 = vmul.f32 %v1774, %v1787
    %v1811 = vmul.f32 %v1775, %v1787
    %v1812 = vmul.f32 %v1776, %v1787
    %v1813 = vmul.f32 %v1777, %v1787
    %v1814 = vmul.f32 %v1778, %v1787
    %v1815 = vmul.f32 %v1779, %v1787
    %v1816 = vmul.f32 %v1780, %v1787
    %v1817 = vmul.f32 %v1781, %v1787
    %v1818 = vmul.f32 %v1782, %v1787
    %v1819 = vmul.f32 %v1783, %v1787
    %1820 = vadd.xlane.f32.xlu0 %v1788
    %v1821 = vpop.xlane.xlu0 %1820
    %1822 = vadd.xlane.f32.xlu0 %v1789
    %v1823 = vpop.xlane.xlu0 %1822
    %1824 = vadd.xlane.f32.xlu0 %v1790
    %v1825 = vpop.xlane.xlu0 %1824
    %1826 = vadd.xlane.f32.xlu0 %v1791
    %v1827 = vpop.xlane.xlu0 %1826
    %1828 = vadd.xlane.f32.xlu0 %v1792
    %v1829 = vpop.xlane.xlu0 %1828
    %1830 = vadd.xlane.f32.xlu0 %v1793
    %v1831 = vpop.xlane.xlu0 %1830
    %1832 = vadd.xlane.f32.xlu0 %v1794
    %v1833 = vpop.xlane.xlu0 %1832
    %1834 = vadd.xlane.f32.xlu0 %v1795
    %v1835 = vpop.xlane.xlu0 %1834
    %1836 = vadd.xlane.f32.xlu0 %v1796
    %v1837 = vpop.xlane.xlu0 %1836
    %1838 = vadd.xlane.f32.xlu0 %v1797
    %v1839 = vpop.xlane.xlu0 %1838
    %1840 = vadd.xlane.f32.xlu0 %v1798
    %v1841 = vpop.xlane.xlu0 %1840
    %1842 = vadd.xlane.f32.xlu0 %v1799
    %v1843 = vpop.xlane.xlu0 %1842
    %1844 = vadd.xlane.f32.xlu0 %v1800
    %v1845 = vpop.xlane.xlu0 %1844
    %1846 = vadd.xlane.f32.xlu0 %v1801
    %v1847 = vpop.xlane.xlu0 %1846
    %1848 = vadd.xlane.f32.xlu0 %v1802
    %v1849 = vpop.xlane.xlu0 %1848
    %1850 = vadd.xlane.f32.xlu0 %v1803
    %v1851 = vpop.xlane.xlu0 %1850
    %1852 = vadd.xlane.f32.xlu0 %v1804
    %v1853 = vpop.xlane.xlu0 %1852
    %1854 = vadd.xlane.f32.xlu0 %v1805
    %v1855 = vpop.xlane.xlu0 %1854
    %1856 = vadd.xlane.f32.xlu0 %v1806
    %v1857 = vpop.xlane.xlu0 %1856
    %1858 = vadd.xlane.f32.xlu0 %v1807
    %v1859 = vpop.xlane.xlu0 %1858
    %1860 = vadd.xlane.f32.xlu0 %v1808
    %v1861 = vpop.xlane.xlu0 %1860
    %1862 = vadd.xlane.f32.xlu0 %v1809
    %v1863 = vpop.xlane.xlu0 %1862
    %1864 = vadd.xlane.f32.xlu0 %v1810
    %v1865 = vpop.xlane.xlu0 %1864
    %1866 = vadd.xlane.f32.xlu0 %v1811
    %v1867 = vpop.xlane.xlu0 %1866
    %1868 = vadd.xlane.f32.xlu0 %v1812
    %v1869 = vpop.xlane.xlu0 %1868
    %1870 = vadd.xlane.f32.xlu0 %v1813
    %v1871 = vpop.xlane.xlu0 %1870
    %1872 = vadd.xlane.f32.xlu0 %v1814
    %v1873 = vpop.xlane.xlu0 %1872
    %1874 = vadd.xlane.f32.xlu0 %v1815
    %v1875 = vpop.xlane.xlu0 %1874
    %1876 = vadd.xlane.f32.xlu0 %v1816
    %v1877 = vpop.xlane.xlu0 %1876
    %1878 = vadd.xlane.f32.xlu0 %v1817
    %v1879 = vpop.xlane.xlu0 %1878
    %1880 = vadd.xlane.f32.xlu0 %v1818
    %v1881 = vpop.xlane.xlu0 %1880
    %1882 = vadd.xlane.f32.xlu0 %v1819
    %v1883 = vpop.xlane.xlu0 %1882
    %v1884 = vlaneseq
    %v1885 = vshrl.u32 %v1884, 7
    %v1886 = vsub.s32 0, %v1885
    %v1887 = vrot.slane %v121, %v1886
    %v1888 = vadd.f32 %v1821, %v1887
    %v1889 = vadd.f32 %v1823, %v1887
    %v1890 = vadd.f32 %v1825, %v1887
    %v1891 = vadd.f32 %v1827, %v1887
    %v1892 = vadd.f32 %v1829, %v1887
    %v1893 = vadd.f32 %v1831, %v1887
    %v1894 = vadd.f32 %v1833, %v1887
    %v1895 = vadd.f32 %v1835, %v1887
    %v1896 = vadd.f32 %v1837, %v1887
    %v1897 = vadd.f32 %v1839, %v1887
    %v1898 = vadd.f32 %v1841, %v1887
    %v1899 = vadd.f32 %v1843, %v1887
    %v1900 = vadd.f32 %v1845, %v1887
    %v1901 = vadd.f32 %v1847, %v1887
    %v1902 = vadd.f32 %v1849, %v1887
    %v1903 = vadd.f32 %v1851, %v1887
    %v1904 = vadd.f32 %v1853, %v1887
    %v1905 = vadd.f32 %v1855, %v1887
    %v1906 = vadd.f32 %v1857, %v1887
    %v1907 = vadd.f32 %v1859, %v1887
    %v1908 = vadd.f32 %v1861, %v1887
    %v1909 = vadd.f32 %v1863, %v1887
    %v1910 = vadd.f32 %v1865, %v1887
    %v1911 = vadd.f32 %v1867, %v1887
    %v1912 = vadd.f32 %v1869, %v1887
    %v1913 = vadd.f32 %v1871, %v1887
    %v1914 = vadd.f32 %v1873, %v1887
    %v1915 = vadd.f32 %v1875, %v1887
    %v1916 = vadd.f32 %v1877, %v1887
    %v1917 = vadd.f32 %v1879, %v1887
    %v1918 = vadd.f32 %v1881, %v1887
    %v1919 = vadd.f32 %v1883, %v1887
    %1921 = vset.pattern.permute.xlu0 0
    %1922 = vperm.xlu0 %1921, %v1888
    %v1923 = vpop.permute.xlu0 %1922
    %1926 = vset.pattern.permute.xlu0 0
    %1927 = vperm.xlu0 %1926, %v1889
    %v1928 = vpop.permute.xlu0 %1927
    %1931 = vset.pattern.permute.xlu0 0
    %1932 = vperm.xlu0 %1931, %v1890
    %v1933 = vpop.permute.xlu0 %1932
    %1936 = vset.pattern.permute.xlu0 0
    %1937 = vperm.xlu0 %1936, %v1891
    %v1938 = vpop.permute.xlu0 %1937
    %1941 = vset.pattern.permute.xlu0 0
    %1942 = vperm.xlu0 %1941, %v1892
    %v1943 = vpop.permute.xlu0 %1942
    %1946 = vset.pattern.permute.xlu0 0
    %1947 = vperm.xlu0 %1946, %v1893
    %v1948 = vpop.permute.xlu0 %1947
    %1951 = vset.pattern.permute.xlu0 0
    %1952 = vperm.xlu0 %1951, %v1894
    %v1953 = vpop.permute.xlu0 %1952
    %1956 = vset.pattern.permute.xlu0 0
    %1957 = vperm.xlu0 %1956, %v1895
    %v1958 = vpop.permute.xlu0 %1957
    %1961 = vset.pattern.permute.xlu0 0
    %1962 = vperm.xlu0 %1961, %v1896
    %v1963 = vpop.permute.xlu0 %1962
    %1966 = vset.pattern.permute.xlu0 0
    %1967 = vperm.xlu0 %1966, %v1897
    %v1968 = vpop.permute.xlu0 %1967
    %1971 = vset.pattern.permute.xlu0 0
    %1972 = vperm.xlu0 %1971, %v1898
    %v1973 = vpop.permute.xlu0 %1972
    %1976 = vset.pattern.permute.xlu0 0
    %1977 = vperm.xlu0 %1976, %v1899
    %v1978 = vpop.permute.xlu0 %1977
    %1981 = vset.pattern.permute.xlu0 0
    %1982 = vperm.xlu0 %1981, %v1900
    %v1983 = vpop.permute.xlu0 %1982
    %1986 = vset.pattern.permute.xlu0 0
    %1987 = vperm.xlu0 %1986, %v1901
    %v1988 = vpop.permute.xlu0 %1987
    %1991 = vset.pattern.permute.xlu0 0
    %1992 = vperm.xlu0 %1991, %v1902
    %v1993 = vpop.permute.xlu0 %1992
    %1996 = vset.pattern.permute.xlu0 0
    %1997 = vperm.xlu0 %1996, %v1903
    %v1998 = vpop.permute.xlu0 %1997
    %2001 = vset.pattern.permute.xlu0 0
    %2002 = vperm.xlu0 %2001, %v1904
    %v2003 = vpop.permute.xlu0 %2002
    %2006 = vset.pattern.permute.xlu0 0
    %2007 = vperm.xlu0 %2006, %v1905
    %v2008 = vpop.permute.xlu0 %2007
    %2011 = vset.pattern.permute.xlu0 0
    %2012 = vperm.xlu0 %2011, %v1906
    %v2013 = vpop.permute.xlu0 %2012
    %2016 = vset.pattern.permute.xlu0 0
    %2017 = vperm.xlu0 %2016, %v1907
    %v2018 = vpop.permute.xlu0 %2017
    %2021 = vset.pattern.permute.xlu0 0
    %2022 = vperm.xlu0 %2021, %v1908
    %v2023 = vpop.permute.xlu0 %2022
    %2026 = vset.pattern.permute.xlu0 0
    %2027 = vperm.xlu0 %2026, %v1909
    %v2028 = vpop.permute.xlu0 %2027
    %2031 = vset.pattern.permute.xlu0 0
    %2032 = vperm.xlu0 %2031, %v1910
    %v2033 = vpop.permute.xlu0 %2032
    %2036 = vset.pattern.permute.xlu0 0
    %2037 = vperm.xlu0 %2036, %v1911
    %v2038 = vpop.permute.xlu0 %2037
    %2041 = vset.pattern.permute.xlu0 0
    %2042 = vperm.xlu0 %2041, %v1912
    %v2043 = vpop.permute.xlu0 %2042
    %2046 = vset.pattern.permute.xlu0 0
    %2047 = vperm.xlu0 %2046, %v1913
    %v2048 = vpop.permute.xlu0 %2047
    %2051 = vset.pattern.permute.xlu0 0
    %2052 = vperm.xlu0 %2051, %v1914
    %v2053 = vpop.permute.xlu0 %2052
    %2056 = vset.pattern.permute.xlu0 0
    %2057 = vperm.xlu0 %2056, %v1915
    %v2058 = vpop.permute.xlu0 %2057
    %2061 = vset.pattern.permute.xlu0 0
    %2062 = vperm.xlu0 %2061, %v1916
    %v2063 = vpop.permute.xlu0 %2062
    %2066 = vset.pattern.permute.xlu0 0
    %2067 = vperm.xlu0 %2066, %v1917
    %v2068 = vpop.permute.xlu0 %2067
    %2071 = vset.pattern.permute.xlu0 0
    %2072 = vperm.xlu0 %2071, %v1918
    %v2073 = vpop.permute.xlu0 %2072
    %2076 = vset.pattern.permute.xlu0 0
    %2077 = vperm.xlu0 %2076, %v1919
    %v2078 = vpop.permute.xlu0 %2077
    %2080 = vst [vmem:[#allocation7] sm:$0xff] %v1923
    %2081 = vst [vmem:[#allocation7 + $0x8] sm:$0xff] %v1928
    %2082 = vst [vmem:[#allocation7 + $0x10] sm:$0xff] %v1933
    %2083 = vst [vmem:[#allocation7 + $0x18] sm:$0xff] %v1938
    %2084 = vst [vmem:[#allocation7 + $0x20] sm:$0xff] %v1943
    %2085 = vst [vmem:[#allocation7 + $0x28] sm:$0xff] %v1948
    %2086 = vst [vmem:[#allocation7 + $0x30] sm:$0xff] %v1953
    %2087 = vst [vmem:[#allocation7 + $0x38] sm:$0xff] %v1958
    %2088 = vst [vmem:[#allocation7 + $0x40] sm:$0xff] %v1963
    %2089 = vst [vmem:[#allocation7 + $0x48] sm:$0xff] %v1968
    %2090 = vst [vmem:[#allocation7 + $0x50] sm:$0xff] %v1973
    %2091 = vst [vmem:[#allocation7 + $0x58] sm:$0xff] %v1978
    %2092 = vst [vmem:[#allocation7 + $0x60] sm:$0xff] %v1983
    %2093 = vst [vmem:[#allocation7 + $0x68] sm:$0xff] %v1988
    %2094 = vst [vmem:[#allocation7 + $0x70] sm:$0xff] %v1993
    %2095 = vst [vmem:[#allocation7 + $0x78] sm:$0xff] %v1998
    %2096 = vst [vmem:[#allocation7 + $0x80] sm:$0xff] %v2003
    %2097 = vst [vmem:[#allocation7 + $0x88] sm:$0xff] %v2008
    %2098 = vst [vmem:[#allocation7 + $0x90] sm:$0xff] %v2013
    %2099 = vst [vmem:[#allocation7 + $0x98] sm:$0xff] %v2018
    %2100 = vst [vmem:[#allocation7 + $0xa0] sm:$0xff] %v2023
    %2101 = vst [vmem:[#allocation7 + $0xa8] sm:$0xff] %v2028
    %2102 = vst [vmem:[#allocation7 + $0xb0] sm:$0xff] %v2033
    %2103 = vst [vmem:[#allocation7 + $0xb8] sm:$0xff] %v2038
    %2104 = vst [vmem:[#allocation7 + $0xc0] sm:$0xff] %v2043
    %2105 = vst [vmem:[#allocation7 + $0xc8] sm:$0xff] %v2048
    %2106 = vst [vmem:[#allocation7 + $0xd0] sm:$0xff] %v2053
    %2107 = vst [vmem:[#allocation7 + $0xd8] sm:$0xff] %v2058
    %2108 = vst [vmem:[#allocation7 + $0xe0] sm:$0xff] %v2063
    %2109 = vst [vmem:[#allocation7 + $0xe8] sm:$0xff] %v2068
    %2110 = vst [vmem:[#allocation7 + $0xf0] sm:$0xff] %v2073
    %2111 = vst [vmem:[#allocation7 + $0xf8] sm:$0xff] %v2078
    // Predicated region
    $region18: #{tpu_custom_call.1} parent=1 // pred_check
      _
    $region19: #{tpu_custom_call.1} parent=1 // pred_check_branch
      %2113 = sbr.rel (0) target = $region21
    $region20: #{tpu_custom_call.1} parent=1 // pred_region
      %s2115 = ssub.s32 4096, 4096
      %2116 = vsyncadd [#allocation4], %s2115
      %s2117 = sshll.u32 [#allocation7], 4
      %s2118 = int_to_ptr.vmem [resolvable:$true] %s2117
      %2123 = dma.vmem_to_hbm [thread:$0]  %s2118, 4096, %s2, [#allocation4], 128, 128, 8
    $region21: #{tpu_custom_call.1} parent=1 // pred_fallthru
      _
    // Predicated region
    $region22: #{tpu_custom_call.1} parent=1 // pred_check
      _
    $region23: #{tpu_custom_call.1} parent=1 // pred_check_branch
      %2125 = sbr.rel (0) target = $region25
    $region24: #{tpu_custom_call.1} parent=1 // pred_region
      %2126 = dma.done [#allocation4], 4096
    $region25: #{tpu_custom_call.1} parent=1 // pred_fallthru
      _
    %2127 = vsyncpa [#allocation3], 1
    %2128 = vsyncpa [#allocation6], 1
    %2129 = vsyncpa [#allocation4], 1

</llo_original>
